<compile_context>
chip_gen: v5e
topology: v5e:2x2
jax: 0.10.0
libtpu: 0.0.40
codegen_flags: <defaults>
</compile_context>

<pallas_src>
import functools

import jax
import jax.numpy as jnp
from jax import lax
from jax.experimental import pallas as pl
from jax.experimental.pallas import tpu as pltpu


def _round_up(x, m):
    return ((x + m - 1) // m) * m


# ---------------------------------------------------------------------------
# Kernel 1: feature transform  H = dinv ⊙ (X @ W), emitted as bf16.
# ---------------------------------------------------------------------------
def transform_kernel(x_ref, w_ref, dinv_ref, h_ref):
    h = jnp.dot(x_ref[...], w_ref[...], preferred_element_type=jnp.float32)
    h_ref[...] = (dinv_ref[...] * h).astype(h_ref.dtype)


# ---------------------------------------------------------------------------
# Kernel 2: aggregation  out = dinv ⊙ (A @ H) + bias
# Grid = (row tiles, K tiles); f32 accumulator lives in VMEM scratch.
# ---------------------------------------------------------------------------
def aggregate_kernel(a_ref, h_ref, dinv_ref, b_ref, o_ref, acc_ref):
    @pl.when(pl.program_id(1) == 0)
    def _():
        acc_ref[...] = jnp.zeros_like(acc_ref)

    acc_ref[...] += jnp.dot(a_ref[...], h_ref[...],
                            preferred_element_type=jnp.float32)

    @pl.when(pl.program_id(1) == pl.num_programs(1) - 1)
    def _():
        o_ref[...] = (dinv_ref[...] * acc_ref[...] + b_ref[...]).astype(o_ref.dtype)


@functools.partial(jax.jit, static_argnames=("tm", "tk"))
def gcn_conv(a_dense, x, weight, bias, *, tm=256, tk=512):
    """a_dense: [N, N] f32 dense adjacency (self loops already added),
       x: [N, F_in], weight: [F_in, F_out], bias: [F_out]."""
    n, f_in = x.shape
    f_out = weight.shape[1]

    # --- O(N) normalization scalars, computed once outside the hot loop.
    #     dinv must include self-loops (parity with PyG add_self_loops=True).
    deg = jnp.sum(a_dense.astype(jnp.float32), axis=1, keepdims=True)      # [N, 1]
    dinv = jnp.where(deg > 0.0, lax.rsqrt(deg), 0.0).astype(jnp.float32)   # inf -> 0

    # --- pad to tile- and lane-friendly shapes (zeros: padded rows/cols inert).
    n_pad = _round_up(n, max(tm, tk))
    f_in_pad = _round_up(f_in, 128)
    f_out_pad = _round_up(f_out, 128)

    a_p = jnp.zeros((n_pad, n_pad), jnp.bfloat16).at[:n, :n].set(
        a_dense.astype(jnp.bfloat16))
    x_p = jnp.zeros((n_pad, f_in_pad), jnp.float32).at[:n, :f_in].set(
        x.astype(jnp.float32))
    w_p = jnp.zeros((f_in_pad, f_out_pad), jnp.float32).at[:f_in, :f_out].set(
        weight.astype(jnp.float32))
    b_p = jnp.zeros((1, f_out_pad), jnp.float32).at[0, :f_out].set(
        bias.astype(jnp.float32))
    dinv_p = jnp.zeros((n_pad, 1), jnp.float32).at[:n].set(dinv)

    # --- Kernel 1: H = dinv * (X @ W)   (row-tiled, bf16 output)
    h = pl.pallas_call(
        transform_kernel,
        out_shape=jax.ShapeDtypeStruct((n_pad, f_out_pad), jnp.bfloat16),
        grid_spec=pltpu.PrefetchScalarGridSpec(
            num_scalar_prefetch=0,
            grid=(n_pad // tm,),
            in_specs=[
                pl.BlockSpec((tm, f_in_pad), lambda i: (i, 0)),
                pl.BlockSpec((f_in_pad, f_out_pad), lambda i: (0, 0)),
                pl.BlockSpec((tm, 1), lambda i: (i, 0)),
            ],
            out_specs=pl.BlockSpec((tm, f_out_pad), lambda i: (i, 0)),
        ),
        compiler_params=pltpu.CompilerParams(
            dimension_semantics=("parallel",)),
    )(x_p, w_p, dinv_p)

    # --- Kernel 2: out = dinv * (A @ H) + bias   (tiled over rows x K)
    # TODO(synk): exploit graph sparsity by scalar-prefetching a nonzero-block
    # list and skipping all-zero (tm, tk) adjacency tiles.
    out_p = pl.pallas_call(
        aggregate_kernel,
        out_shape=jax.ShapeDtypeStruct((n_pad, f_out_pad), x.dtype),
        grid_spec=pltpu.PrefetchScalarGridSpec(
            num_scalar_prefetch=0,
            grid=(n_pad // tm, n_pad // tk),
            in_specs=[
                pl.BlockSpec((tm, tk), lambda i, k: (i, k)),            # A tile (bf16)
                pl.BlockSpec((tk, f_out_pad), lambda i, k: (k, 0)),     # H tile (bf16)
                pl.BlockSpec((tm, 1), lambda i, k: (i, 0)),             # dinv rows
                pl.BlockSpec((1, f_out_pad), lambda i, k: (0, 0)),      # bias
            ],
            out_specs=pl.BlockSpec((tm, f_out_pad), lambda i, k: (i, 0)),
            scratch_shapes=[pltpu.VMEM((tm, f_out_pad), jnp.float32)],
        ),
        compiler_params=pltpu.CompilerParams(
            dimension_semantics=("parallel", "arbitrary")),
    )(a_p, h, dinv_p, b_p)

    return out_p[:n, :f_out]


def build_dense_adj(edge_index, edge_weight, num_nodes, add_self_loops=True,
                    improved=False, dtype=jnp.float32):
    """Glue: scatter COO edges into a dense [N, N] adjacency A[dst, src]."""
    src, dst = edge_index[0], edge_index[1]
    if edge_weight is None:
        edge_weight = jnp.ones((src.shape[0],), dtype=dtype)
    a = jnp.zeros((num_nodes, num_nodes), dtype=dtype)
    a = a.at[dst, src].add(edge_weight.astype(dtype))
    if add_self_loops:
        fill = 2.0 if improved else 1.0
        a = a + fill * jnp.eye(num_nodes, dtype=dtype)
    return a


if __name__ == "__main__":
    key = jax.random.PRNGKey(0)
    k_x, k_w = jax.random.split(key)

    num_nodes = 16
    in_channels = 32
    out_channels = 32

    # Node features
    x = jax.random.normal(k_x, (num_nodes, in_channels), dtype=jnp.float32)

    # Small deterministic graph: a ring (both directions)
    idx = jnp.arange(num_nodes)
    src = jnp.concatenate([idx, (idx + 1) % num_nodes])
    dst = jnp.concatenate([(idx + 1) % num_nodes, idx])
    edge_index = jnp.stack([src, dst], axis=0)          # [2, 2N]
    edge_weight = None                                  # defaults to ones

    # Parameters: glorot(weight), zeros(bias)  (deterministic init)
    limit = (6.0 / (in_channels + out_channels)) ** 0.5
    weight = jax.random.uniform(k_w, (in_channels, out_channels),
                                minval=-limit, maxval=limit, dtype=jnp.float32)
    bias = jnp.zeros((out_channels,), dtype=jnp.float32)

    a_dense = build_dense_adj(edge_index, edge_weight, num_nodes,
                              add_self_loops=True, improved=False)

    out = gcn_conv(a_dense, x, weight, bias)
    out = jax.block_until_ready(out)

    # Plain-JAX f32 reference (same math as the PyG module)
    deg = jnp.sum(a_dense, axis=1, keepdims=True)
    dinv = jnp.where(deg > 0, 1.0 / jnp.sqrt(deg), 0.0)
    a_norm = dinv * a_dense * dinv.T
    ref = a_norm @ (x @ weight) + bias[None, :]

    # bf16 streaming of A/H trades a little precision for half the HBM bytes.
    assert out.shape == (num_nodes, out_channels)
    assert jnp.allclose(out, ref, atol=5e-2, rtol=5e-2)

    print("KERNEL_OK")
</pallas_src>

<mosaic_0001>
module attributes {stable_mosaic.version = 11 : i64} {
  func.func @transform_kernel(%arg0: i32, %arg1: memref<256x128xf32, #tpu.memory_space<vmem>>, %arg2: memref<128x128xf32, #tpu.memory_space<vmem>>, %arg3: memref<256x1xf32, #tpu.memory_space<vmem>>, %arg4: memref<256x128xbf16, #tpu.memory_space<vmem>>) attributes {dimension_semantics = [#tpu.dimension_semantics<parallel>], iteration_bounds = array<i64: 2>, scalar_prefetch = 0 : i64, scratch_operands = 0 : i64, tpu.core_type = #tpu.core_type<tc>, window_params = [{transform_indices = @transform_0, window_bounds = array<i64: 256, 128>}, {pipeline_mode = #tpu.pipeline_mode<synchronous>, transform_indices = @transform_1, window_bounds = array<i64: 128, 128>}, {transform_indices = @transform_2, window_bounds = array<i64: 256, 1>}, {transform_indices = @transform_3, window_bounds = array<i64: 256, 128>}]} {
    %c0 = arith.constant 0 : index
    %c0_0 = arith.constant 0 : index
    %0 = vector.load %arg1[%c0, %c0_0] : memref<256x128xf32, #tpu.memory_space<vmem>>, vector<256x128xf32>
    %c0_1 = arith.constant 0 : index
    %c0_2 = arith.constant 0 : index
    %1 = vector.load %arg2[%c0_1, %c0_2] : memref<128x128xf32, #tpu.memory_space<vmem>>, vector<128x128xf32>
    %cst = arith.constant dense<0.000000e+00> : vector<256x128xf32>
    %2 = tpu.matmul %0, %1, %cst {dimension_numbers = #tpu.dot_dimension_numbers<[1], [0], [0], [1], [0, 0, 1, 1], [], []>} : vector<256x128xf32>, vector<128x128xf32>, vector<256x128xf32> -> vector<256x128xf32>
    %c0_3 = arith.constant 0 : index
    %c0_4 = arith.constant 0 : index
    %3 = vector.load %arg3[%c0_3, %c0_4] : memref<256x1xf32, #tpu.memory_space<vmem>>, vector<256x1xf32>
    %4 = vector.broadcast %3 : vector<256x1xf32> to vector<256x128xf32>
    %5 = arith.mulf %4, %2 : vector<256x128xf32>
    %6 = arith.truncf %5 : vector<256x128xf32> to vector<256x128xbf16>
    %c0_5 = arith.constant 0 : index
    %c0_6 = arith.constant 0 : index
    %7 = vector.load %arg4[%c0_5, %c0_6] : memref<256x128xbf16, #tpu.memory_space<vmem>>, vector<256x128xbf16>
    tpu.vector_store %arg4[%c0_5, %c0_6], %6 {strides = array<i32>} : memref<256x128xbf16, #tpu.memory_space<vmem>>, vector<256x128xbf16>,
    return
  }
  func.func @transform_0(%arg0: i32) -> (i32, i32) {
    %c0_i32 = arith.constant 0 : i32
    %c0_i32_0 = arith.constant 0 : i32
    return %arg0, %c0_i32 : i32, i32
  }
  func.func @transform_1(%arg0: i32) -> (i32, i32) {
    %c0_i32 = arith.constant 0 : i32
    %c0_i32_0 = arith.constant 0 : i32
    %c0_i32_1 = arith.constant 0 : i32
    return %c0_i32, %c0_i32_0 : i32, i32
  }
  func.func @transform_2(%arg0: i32) -> (i32, i32) {
    %c0_i32 = arith.constant 0 : i32
    %c0_i32_0 = arith.constant 0 : i32
    return %arg0, %c0_i32 : i32, i32
  }
  func.func @transform_3(%arg0: i32) -> (i32, i32) {
    %c0_i32 = arith.constant 0 : i32
    %c0_i32_0 = arith.constant 0 : i32
    return %arg0, %c0_i32 : i32, i32
  }
}

module attributes {stable_mosaic.version = 11 : i64} {
  func.func @aggregate_kernel(%arg0: i32, %arg1: i32, %arg2: memref<256x512xbf16, #tpu.memory_space<vmem>>, %arg3: memref<512x128xbf16, #tpu.memory_space<vmem>>, %arg4: memref<256x1xf32, #tpu.memory_space<vmem>>, %arg5: memref<1x128xf32, #tpu.memory_space<vmem>>, %arg6: memref<256x128xf32, #tpu.memory_space<vmem>>, %arg7: memref<256x128xf32, #tpu.memory_space<vmem>>) attributes {dimension_semantics = [#tpu.dimension_semantics<parallel>, #tpu.dimension_semantics<arbitrary>], iteration_bounds = array<i64: 2, 1>, scalar_prefetch = 0 : i64, scratch_operands = 1 : i64, tpu.core_type = #tpu.core_type<tc>, window_params = [{transform_indices = @transform_0, window_bounds = array<i64: 256, 512>}, {transform_indices = @transform_1, window_bounds = array<i64: 512, 128>}, {transform_indices = @transform_2, window_bounds = array<i64: 256, 1>}, {pipeline_mode = #tpu.pipeline_mode<synchronous>, transform_indices = @transform_3, window_bounds = array<i64: 1, 128>}, {transform_indices = @transform_4, window_bounds = array<i64: 256, 128>}]} {
    %c0_i32 = arith.constant 0 : i32
    %0 = arith.cmpi eq, %arg1, %c0_i32 : i32
    %1 = arith.extui %0 : i1 to i32
    %c0_i32_0 = arith.constant 0 : i32
    %2 = arith.cmpi ne, %1, %c0_i32_0 : i32
    scf.if %2 {
      %cst_10 = arith.constant 0.000000e+00 : f32
      %12 = vector.broadcast %cst_10 : f32 to vector<256x128xf32>
      %c0_11 = arith.constant 0 : index
      %c0_12 = arith.constant 0 : index
      %13 = vector.load %arg7[%c0_11, %c0_12] : memref<256x128xf32, #tpu.memory_space<vmem>>, vector<256x128xf32>
      tpu.vector_store %arg7[%c0_11, %c0_12], %12 {strides = array<i32>} : memref<256x128xf32, #tpu.memory_space<vmem>>, vector<256x128xf32>,
    } else {
    }
    %c0 = arith.constant 0 : index
    %c0_1 = arith.constant 0 : index
    %3 = vector.load %arg7[%c0, %c0_1] : memref<256x128xf32, #tpu.memory_space<vmem>>, vector<256x128xf32>
    %c0_2 = arith.constant 0 : index
    %c0_3 = arith.constant 0 : index
    %4 = vector.load %arg2[%c0_2, %c0_3] : memref<256x512xbf16, #tpu.memory_space<vmem>>, vector<256x512xbf16>
    %c0_4 = arith.constant 0 : index
    %c0_5 = arith.constant 0 : index
    %5 = vector.load %arg3[%c0_4, %c0_5] : memref<512x128xbf16, #tpu.memory_space<vmem>>, vector<512x128xbf16>
    %cst = arith.constant dense<0.000000e+00> : vector<256x128xf32>
    %6 = tpu.matmul %4, %5, %cst {dimension_numbers = #tpu.dot_dimension_numbers<[1], [0], [0], [1], [0, 0, 1, 1], [], []>} : vector<256x512xbf16>, vector<512x128xbf16>, vector<256x128xf32> -> vector<256x128xf32>
    %7 = arith.addf %3, %6 : vector<256x128xf32>
    %c0_6 = arith.constant 0 : index
    %c0_7 = arith.constant 0 : index
    %8 = vector.load %arg7[%c0_6, %c0_7] : memref<256x128xf32, #tpu.memory_space<vmem>>, vector<256x128xf32>
    tpu.vector_store %arg7[%c0_6, %c0_7], %7 {strides = array<i32>} : memref<256x128xf32, #tpu.memory_space<vmem>>, vector<256x128xf32>,
    %c0_i32_8 = arith.constant 0 : i32
    %9 = arith.cmpi eq, %arg1, %c0_i32_8 : i32
    %10 = arith.extui %9 : i1 to i32
    %c0_i32_9 = arith.constant 0 : i32
    %11 = arith.cmpi ne, %10, %c0_i32_9 : i32
    scf.if %11 {
      %c0_10 = arith.constant 0 : index
      %c0_11 = arith.constant 0 : index
      %12 = vector.load %arg4[%c0_10, %c0_11] : memref<256x1xf32, #tpu.memory_space<vmem>>, vector<256x1xf32>
      %c0_12 = arith.constant 0 : index
      %c0_13 = arith.constant 0 : index
      %13 = vector.load %arg7[%c0_12, %c0_13] : memref<256x128xf32, #tpu.memory_space<vmem>>, vector<256x128xf32>
      %14 = vector.broadcast %12 : vector<256x1xf32> to vector<256x128xf32>
      %15 = arith.mulf %14, %13 : vector<256x128xf32>
      %c0_14 = arith.constant 0 : index
      %c0_15 = arith.constant 0 : index
      %16 = vector.load %arg5[%c0_14, %c0_15] : memref<1x128xf32, #tpu.memory_space<vmem>>, vector<1x128xf32>
      %17 = vector.broadcast %16 : vector<1x128xf32> to vector<256x128xf32>
      %18 = arith.addf %15, %17 : vector<256x128xf32>
      %c0_16 = arith.constant 0 : index
      %c0_17 = arith.constant 0 : index
      %19 = vector.load %arg6[%c0_16, %c0_17] : memref<256x128xf32, #tpu.memory_space<vmem>>, vector<256x128xf32>
      tpu.vector_store %arg6[%c0_16, %c0_17], %18 {strides = array<i32>} : memref<256x128xf32, #tpu.memory_space<vmem>>, vector<256x128xf32>,
    } else {
    }
    return
  }
  func.func @transform_0(%arg0: i32, %arg1: i32) -> (i32, i32) {
    %c0_i32 = arith.constant 0 : i32
    return %arg0, %arg1 : i32, i32
  }
  func.func @transform_1(%arg0: i32, %arg1: i32) -> (i32, i32) {
    %c0_i32 = arith.constant 0 : i32
    %c0_i32_0 = arith.constant 0 : i32
    return %arg1, %c0_i32 : i32, i32
  }
  func.func @transform_2(%arg0: i32, %arg1: i32) -> (i32, i32) {
    %c0_i32 = arith.constant 0 : i32
    %c0_i32_0 = arith.constant 0 : i32
    return %arg0, %c0_i32 : i32, i32
  }
  func.func @transform_3(%arg0: i32, %arg1: i32) -> (i32, i32) {
    %c0_i32 = arith.constant 0 : i32
    %c0_i32_0 = arith.constant 0 : i32
    %c0_i32_1 = arith.constant 0 : i32
    return %c0_i32, %c0_i32_0 : i32, i32
  }
  func.func @transform_4(%arg0: i32, %arg1: i32) -> (i32, i32) {
    %c0_i32 = arith.constant 0 : i32
    %c0_i32_0 = arith.constant 0 : i32
    return %arg0, %c0_i32 : i32, i32
  }
}

</mosaic_0001>

<llo_original>
// kernel: gcn_conv.2
$region0: #{gcn_conv.2}
  #allocation0 [shape = 'u32[]', space=smem, size = 0x4, offset = 0x4, fixed_abs, tag = 'smem constant byte address 0x4 - core index']
  #allocation1 [shape = 'u32[72,128]{1,0:T(1,128)}', space=vmem, size = 0x9000, scoped, tag = 'internal scratch']
  %s0 = inlined_call_operand.vmem [shape: f32[512,128], index: 0, kind: input, shape index: {}]
  %s1 = inlined_call_operand.vmem [shape: f32[128,128], index: 1, kind: input, shape index: {}]
  %s2 = inlined_call_operand.vmem [shape: f32[512,1], index: 2, kind: input, shape index: {}]
  %s3 = inlined_call_operand.vmem [shape: bf16[512,128], index: 3, kind: output, shape index: {}]
  %s4 = sld [smem:[#allocation0]]
  $region45: #{gcn_conv.2} parent=0
    _
  %s6 = ssub.s32 1, %s4
  %s7 = scalar_select 0, %s6, %s4
  loop: start=0, step=1, limit=4
  $region2: #{gcn_conv.2} parent=0 // loop_pre_header
    _
  $region3: #{gcn_conv.2} parent=0 // loop_header
    %s9 = sphi 0, %s13
    %p10 = scmp.ge.s32.totalorder %s9, 4
    %s19 = sphi 0, %s21
    %s22 = sphi 0, %s19
    %s23 = sphi 0, %s22
    %s39 = sphi 0, %s23
    %s43 = sphi 0, %s43
    %s45 = sphi 0, %s43
    %s46 = sphi 0, %s45
    %s60 = sphi 0, %s46
    %s66 = sphi 0, %s68
    %s69 = sphi 0, %s66
    %s70 = sphi 0, %s69
    %s86 = sphi 0, %s70
    %s92 = sphi 0, %s94
    %s95 = sphi 0, %s92
    %s96 = sphi 0, %s95
    %s112 = sphi 0, %s96
  $region4: #{gcn_conv.2} parent=0 // loop_header_branch
    %12 = sbr.rel (%p10) target = $region8
  $region5: #{gcn_conv.2} parent=0 // loop_body
    %s14 = ssub.s32 %s9, 1
    %s15 = ssub.s32 %s9, 2
    %s16 = sadd.s32 %s9, 1
    %s17 = ssub.s32 %s9, %s16
    %p18 = scmp.eq.s32.totalorder %s17, 0
    %s20 = sadd.s32 %s19, 1
    %s21 = scalar_select %p18, %s19, %s20
    %p24 = pneg %p18
    %p25 = scmp.eq.s32.totalorder %s9, 1
    %p26 = por %p24, %p25
    %p27 = scmp.ne.s32.totalorder %s19, %s22
    %p28 = scmp.eq.s32.totalorder %s9, 0
    %p29 = por %p27, %p28
    %p30 = scmp.ne.s32.totalorder %s19, %s22
    %p31 = scmp.eq.s32.totalorder %s14, 1
    %p32 = por %p30, %p31
    %p33 = scmp.ne.s32.totalorder %s22, %s23
    %p34 = scmp.eq.s32.totalorder %s14, 0
    %p35 = por %p33, %p34
    %p36 = scmp.ne.s32.totalorder %s22, %s23
    %p37 = scmp.eq.s32.totalorder %s15, 1
    %p38 = por %p36, %p37
    %p40 = scmp.ne.s32.totalorder %s23, %s39
    %p41 = scmp.eq.s32.totalorder %s15, 0
    %p42 = por %p40, %p41
    %s44 = sadd.s32 %s43, 1
    %p47 = scmp.eq.s32.totalorder %s9, 1
    %p48 = scmp.ne.s32.totalorder %s43, %s45
    %p49 = scmp.eq.s32.totalorder %s9, 0
    %p50 = por %p48, %p49
    %p51 = scmp.ne.s32.totalorder %s43, %s45
    %p52 = scmp.eq.s32.totalorder %s14, 1
    %p53 = por %p51, %p52
    %p54 = scmp.ne.s32.totalorder %s45, %s46
    %p55 = scmp.eq.s32.totalorder %s14, 0
    %p56 = por %p54, %p55
    %p57 = scmp.ne.s32.totalorder %s45, %s46
    %p58 = scmp.eq.s32.totalorder %s15, 1
    %p59 = por %p57, %p58
    %p61 = scmp.ne.s32.totalorder %s46, %s60
    %p62 = scmp.eq.s32.totalorder %s15, 0
    %p63 = por %p61, %p62
    %s64 = ssub.s32 %s9, %s16
    %p65 = scmp.eq.s32.totalorder %s64, 0
    %s67 = sadd.s32 %s66, 1
    %s68 = scalar_select %p65, %s66, %s67
    %p71 = pneg %p65
    %p72 = scmp.eq.s32.totalorder %s9, 1
    %p73 = por %p71, %p72
    %p74 = scmp.ne.s32.totalorder %s66, %s69
    %p75 = scmp.eq.s32.totalorder %s9, 0
    %p76 = por %p74, %p75
    %p77 = scmp.ne.s32.totalorder %s66, %s69
    %p78 = scmp.eq.s32.totalorder %s14, 1
    %p79 = por %p77, %p78
    %p80 = scmp.ne.s32.totalorder %s69, %s70
    %p81 = scmp.eq.s32.totalorder %s14, 0
    %p82 = por %p80, %p81
    %p83 = scmp.ne.s32.totalorder %s69, %s70
    %p84 = scmp.eq.s32.totalorder %s15, 1
    %p85 = por %p83, %p84
    %p87 = scmp.ne.s32.totalorder %s70, %s86
    %p88 = scmp.eq.s32.totalorder %s15, 0
    %p89 = por %p87, %p88
    %s90 = ssub.s32 %s9, %s16
    %p91 = scmp.eq.s32.totalorder %s90, 0
    %s93 = sadd.s32 %s92, 1
    %s94 = scalar_select %p91, %s92, %s93
    %p97 = pneg %p91
    %p98 = scmp.eq.s32.totalorder %s9, 1
    %p99 = por %p97, %p98
    %p100 = scmp.ne.s32.totalorder %s92, %s95
    %p101 = scmp.eq.s32.totalorder %s9, 0
    %p102 = por %p100, %p101
    %p103 = scmp.ne.s32.totalorder %s92, %s95
    %p104 = scmp.eq.s32.totalorder %s14, 1
    %p105 = por %p103, %p104
    %p106 = scmp.ne.s32.totalorder %s95, %s96
    %p107 = scmp.eq.s32.totalorder %s14, 0
    %p108 = por %p106, %p107
    %p109 = scmp.ne.s32.totalorder %s95, %s96
    %p110 = scmp.eq.s32.totalorder %s15, 1
    %p111 = por %p109, %p110
    %p113 = scmp.ne.s32.totalorder %s96, %s112
    %p114 = scmp.eq.s32.totalorder %s15, 0
    %p115 = por %p113, %p114
    %p116 = scmp.le.s32.totalorder 1, %s9
    %p117 = scmp.lt.s32.totalorder %s9, 3
    %p118 = pnand %p116, %p117
    %p119 = pneg %p118
    // Predicated region
    $region9: #{gcn_conv.2} parent=5 // pred_check
      _
    $region10: #{gcn_conv.2} parent=5 // pred_check_branch
      %121 = sbr.rel (%p118) target = $region12
    $region11: #{gcn_conv.2} parent=5 // pred_region
      %s122 = ssub.s32 %s9, 1
      // Predicated region
      $region13: #{gcn_conv.2} parent=11 // pred_check
        %p123 = pneg %p56
      $region14: #{gcn_conv.2} parent=11 // pred_check_branch
        %125 = sbr.rel (%p123) target = $region16
      $region15: #{gcn_conv.2} parent=11 // pred_region
        _
      $region16: #{gcn_conv.2} parent=11 // pred_fallthru
        _
    $region12: #{gcn_conv.2} parent=5 // pred_fallthru
      _
    %p126 = scmp.lt.s32.totalorder %s9, 2
    // Predicated region
    $region17: #{gcn_conv.2} parent=5 // pred_check
      %p127 = pneg %p126
    $region18: #{gcn_conv.2} parent=5 // pred_check_branch
      %129 = sbr.rel (%p127) target = $region20
    $region19: #{gcn_conv.2} parent=5 // pred_region
      // Predicated region
      $region21: #{gcn_conv.2} parent=19 // pred_check
        %p130 = pneg %p29
      $region22: #{gcn_conv.2} parent=19 // pred_check_branch
        %132 = sbr.rel (%p130) target = $region24
      $region23: #{gcn_conv.2} parent=19 // pred_region
        %s133 = smul.u32 32, %s9
        %p134 = scmp.lt.s32.totalorder %s133, 63
        %s135 = scalar_select %p134, %s133, 63
        %s136 = smul.addr %s135, 8
        %s137 = scalar_lea.vmem %s0, %s136
        %s138 = smul.u32 32, %s9
      $region24: #{gcn_conv.2} parent=19 // pred_fallthru
        _
      // Predicated region
      $region25: #{gcn_conv.2} parent=19 // pred_check
        %p139 = pneg %p76
      $region26: #{gcn_conv.2} parent=19 // pred_check_branch
        %141 = sbr.rel (%p139) target = $region28
      $region27: #{gcn_conv.2} parent=19 // pred_region
        %s142 = smul.u32 32, %s9
        %p143 = scmp.lt.s32.totalorder %s142, 63
        %s144 = scalar_select %p143, %s142, 63
        %s145 = smul.addr %s144, 8
        %s146 = scalar_lea.vmem %s2, %s145
        %s147 = smul.u32 32, %s9
      $region28: #{gcn_conv.2} parent=19 // pred_fallthru
        _
    $region20: #{gcn_conv.2} parent=5 // pred_fallthru
      _
    %p148 = scmp.le.s32.totalorder 1, %s9
    %p149 = scmp.lt.s32.totalorder %s9, 3
    %p150 = pnand %p148, %p149
    %p151 = pneg %p150
    // Predicated region
    $region29: #{gcn_conv.2} parent=5 // pred_check
      _
    $region30: #{gcn_conv.2} parent=5 // pred_check_branch
      %153 = sbr.rel (%p150) target = $region32
    $region31: #{gcn_conv.2} parent=5 // pred_region
      %s154 = ssub.s32 %s9, 1
      %s155 = smul.u32 32, %s14
      %p156 = scmp.lt.s32.totalorder %s155, 63
      %s157 = scalar_select %p156, %s155, 63
      %s158 = smul.addr %s157, 8
      %s159 = scalar_lea.vmem %s0, %s158
      %p160 = pneg %p35
      %p161 = pneg %p32
      %p162 = pneg %p56
      %p163 = pneg %p53
      %s164 = smul.u32 32, %s14
      %p165 = scmp.lt.s32.totalorder %s164, 63
      %s166 = scalar_select %p165, %s164, 63
      %s167 = smul.addr %s166, 8
      %s168 = scalar_lea.vmem %s2, %s167
      %p169 = pneg %p82
      %p170 = pneg %p79
      %p171 = pneg %p108
      %p172 = pneg %p105
      %s173 = smul.u32 32, %s14
      %p174 = scmp.lt.s32.totalorder %s173, 63
      %s175 = scalar_select %p174, %s173, 63
      %s176 = smul.addr %s175, 4
      %s177 = scalar_lea.vmem %s3, %s176
      %s178 = smul.u32 32, %s14
      %p179 = scmp.lt.s32.totalorder %s178, 63
      %s180 = scalar_select %p179, %s178, 63
      %s181 = smul.addr %s180, 8
      %s182 = scalar_lea.vmem %s0, %s181
      %s183 = smul.u32 32, %s14
      %s184 = smul.u32 32, %s14
      %p185 = scmp.lt.s32.totalorder %s184, 63
      %s186 = scalar_select %p185, %s184, 63
      %s187 = smul.addr %s186, 8
      %s188 = scalar_lea.vmem %s2, %s187
      %s189 = smul.u32 32, %s14
      %s190 = smul.u32 32, %s14
      %p191 = scmp.lt.s32.totalorder %s190, 63
      %s192 = scalar_select %p191, %s190, 63
      %s193 = smul.addr %s192, 4
      %s194 = scalar_lea.vmem %s3, %s193
      %s195 = smul.u32 32, %s14
      %v196 = vld [vmem:[%s182] sm:$0xff]
      %v197 = vld [vmem:[%s182 + $0x8] sm:$0xff]
      %v198 = vld [vmem:[%s182 + $0x10] sm:$0xff]
      %v199 = vld [vmem:[%s182 + $0x18] sm:$0xff]
      %v200 = vld [vmem:[%s182 + $0x20] sm:$0xff]
      %v201 = vld [vmem:[%s182 + $0x28] sm:$0xff]
      %v202 = vld [vmem:[%s182 + $0x30] sm:$0xff]
      %v203 = vld [vmem:[%s182 + $0x38] sm:$0xff]
      %v204 = vld [vmem:[%s182 + $0x40] sm:$0xff]
      %v205 = vld [vmem:[%s182 + $0x48] sm:$0xff]
      %v206 = vld [vmem:[%s182 + $0x50] sm:$0xff]
      %v207 = vld [vmem:[%s182 + $0x58] sm:$0xff]
      %v208 = vld [vmem:[%s182 + $0x60] sm:$0xff]
      %v209 = vld [vmem:[%s182 + $0x68] sm:$0xff]
      %v210 = vld [vmem:[%s182 + $0x70] sm:$0xff]
      %v211 = vld [vmem:[%s182 + $0x78] sm:$0xff]
      %v212 = vld [vmem:[%s182 + $0x80] sm:$0xff]
      %v213 = vld [vmem:[%s182 + $0x88] sm:$0xff]
      %v214 = vld [vmem:[%s182 + $0x90] sm:$0xff]
      %v215 = vld [vmem:[%s182 + $0x98] sm:$0xff]
      %v216 = vld [vmem:[%s182 + $0xa0] sm:$0xff]
      %v217 = vld [vmem:[%s182 + $0xa8] sm:$0xff]
      %v218 = vld [vmem:[%s182 + $0xb0] sm:$0xff]
      %v219 = vld [vmem:[%s182 + $0xb8] sm:$0xff]
      %v220 = vld [vmem:[%s182 + $0xc0] sm:$0xff]
      %v221 = vld [vmem:[%s182 + $0xc8] sm:$0xff]
      %v222 = vld [vmem:[%s182 + $0xd0] sm:$0xff]
      %v223 = vld [vmem:[%s182 + $0xd8] sm:$0xff]
      %v224 = vld [vmem:[%s182 + $0xe0] sm:$0xff]
      %v225 = vld [vmem:[%s182 + $0xe8] sm:$0xff]
      %v226 = vld [vmem:[%s182 + $0xf0] sm:$0xff]
      %v227 = vld [vmem:[%s182 + $0xf8] sm:$0xff]
      %v228 = vld [vmem:[%s1] sm:$0xff]
      %v229 = vld [vmem:[%s1 + $0x8] sm:$0xff]
      %v230 = vld [vmem:[%s1 + $0x10] sm:$0xff]
      %v231 = vld [vmem:[%s1 + $0x18] sm:$0xff]
      %v232 = vld [vmem:[%s1 + $0x20] sm:$0xff]
      %v233 = vld [vmem:[%s1 + $0x28] sm:$0xff]
      %v234 = vld [vmem:[%s1 + $0x30] sm:$0xff]
      %v235 = vld [vmem:[%s1 + $0x38] sm:$0xff]
      %v236 = vld [vmem:[%s1 + $0x40] sm:$0xff]
      %v237 = vld [vmem:[%s1 + $0x48] sm:$0xff]
      %v238 = vld [vmem:[%s1 + $0x50] sm:$0xff]
      %v239 = vld [vmem:[%s1 + $0x58] sm:$0xff]
      %v240 = vld [vmem:[%s1 + $0x60] sm:$0xff]
      %v241 = vld [vmem:[%s1 + $0x68] sm:$0xff]
      %v242 = vld [vmem:[%s1 + $0x70] sm:$0xff]
      %v243 = vld [vmem:[%s1 + $0x78] sm:$0xff]
      %244 = vmatpush.msra.mxu0 %v243
      %245 = vmatpush.msra.mxu0 %v242
      %246 = vmatpush.msra.mxu0 %v241
      %247 = vmatpush.msra.mxu0 %v240
      %248 = vmatpush.msra.mxu0 %v239
      %249 = vmatpush.msra.mxu0 %v238
      %250 = vmatpush.msra.mxu0 %v237
      %251 = vmatpush.msra.mxu0 %v236
      %252 = vmatpush.msra.mxu0 %v235
      %253 = vmatpush.msra.mxu0 %v234
      %254 = vmatpush.msra.mxu0 %v233
      %255 = vmatpush.msra.mxu0 %v232
      %256 = vmatpush.msra.mxu0 %v231
      %257 = vmatpush.msra.mxu0 %v230
      %258 = vmatpush.msra.mxu0 %v229
      %259 = vmatpush.msra.mxu0 %v228
      %260 = vmatmul.f32.gmra.mxu0 %v196
      %v261 = vpop.f32.mrf.mxu0
      %v262 = vadd.f32 0.0, %v261
      %263 = vmatmul.f32.gmra.mxu0 %v197
      %v264 = vpop.f32.mrf.mxu0
      %v265 = vadd.f32 0.0, %v264
      %266 = vmatmul.f32.gmra.mxu0 %v198
      %v267 = vpop.f32.mrf.mxu0
      %v268 = vadd.f32 0.0, %v267
      %269 = vmatmul.f32.gmra.mxu0 %v199
      %v270 = vpop.f32.mrf.mxu0
      %v271 = vadd.f32 0.0, %v270
      %272 = vmatmul.f32.gmra.mxu0 %v200
      %v273 = vpop.f32.mrf.mxu0
      %v274 = vadd.f32 0.0, %v273
      %275 = vmatmul.f32.gmra.mxu0 %v201
      %v276 = vpop.f32.mrf.mxu0
      %v277 = vadd.f32 0.0, %v276
      %278 = vmatmul.f32.gmra.mxu0 %v202
      %v279 = vpop.f32.mrf.mxu0
      %v280 = vadd.f32 0.0, %v279
      %281 = vmatmul.f32.gmra.mxu0 %v203
      %v282 = vpop.f32.mrf.mxu0
      %v283 = vadd.f32 0.0, %v282
      %284 = vmatmul.f32.gmra.mxu0 %v204
      %v285 = vpop.f32.mrf.mxu0
      %v286 = vadd.f32 0.0, %v285
      %287 = vmatmul.f32.gmra.mxu0 %v205
      %v288 = vpop.f32.mrf.mxu0
      %v289 = vadd.f32 0.0, %v288
      %290 = vmatmul.f32.gmra.mxu0 %v206
      %v291 = vpop.f32.mrf.mxu0
      %v292 = vadd.f32 0.0, %v291
      %293 = vmatmul.f32.gmra.mxu0 %v207
      %v294 = vpop.f32.mrf.mxu0
      %v295 = vadd.f32 0.0, %v294
      %296 = vmatmul.f32.gmra.mxu0 %v208
      %v297 = vpop.f32.mrf.mxu0
      %v298 = vadd.f32 0.0, %v297
      %299 = vmatmul.f32.gmra.mxu0 %v209
      %v300 = vpop.f32.mrf.mxu0
      %v301 = vadd.f32 0.0, %v300
      %302 = vmatmul.f32.gmra.mxu0 %v210
      %v303 = vpop.f32.mrf.mxu0
      %v304 = vadd.f32 0.0, %v303
      %305 = vmatmul.f32.gmra.mxu0 %v211
      %v306 = vpop.f32.mrf.mxu0
      %v307 = vadd.f32 0.0, %v306
      %308 = vmatmul.f32.gmra.mxu0 %v212
      %v309 = vpop.f32.mrf.mxu0
      %v310 = vadd.f32 0.0, %v309
      %311 = vmatmul.f32.gmra.mxu0 %v213
      %v312 = vpop.f32.mrf.mxu0
      %v313 = vadd.f32 0.0, %v312
      %314 = vmatmul.f32.gmra.mxu0 %v214
      %v315 = vpop.f32.mrf.mxu0
      %v316 = vadd.f32 0.0, %v315
      %317 = vmatmul.f32.gmra.mxu0 %v215
      %v318 = vpop.f32.mrf.mxu0
      %v319 = vadd.f32 0.0, %v318
      %320 = vmatmul.f32.gmra.mxu0 %v216
      %v321 = vpop.f32.mrf.mxu0
      %v322 = vadd.f32 0.0, %v321
      %323 = vmatmul.f32.gmra.mxu0 %v217
      %v324 = vpop.f32.mrf.mxu0
      %v325 = vadd.f32 0.0, %v324
      %326 = vmatmul.f32.gmra.mxu0 %v218
      %v327 = vpop.f32.mrf.mxu0
      %v328 = vadd.f32 0.0, %v327
      %329 = vmatmul.f32.gmra.mxu0 %v219
      %v330 = vpop.f32.mrf.mxu0
      %v331 = vadd.f32 0.0, %v330
      %332 = vmatmul.f32.gmra.mxu0 %v220
      %v333 = vpop.f32.mrf.mxu0
      %v334 = vadd.f32 0.0, %v333
      %335 = vmatmul.f32.gmra.mxu0 %v221
      %v336 = vpop.f32.mrf.mxu0
      %v337 = vadd.f32 0.0, %v336
      %338 = vmatmul.f32.gmra.mxu0 %v222
      %v339 = vpop.f32.mrf.mxu0
      %v340 = vadd.f32 0.0, %v339
      %341 = vmatmul.f32.gmra.mxu0 %v223
      %v342 = vpop.f32.mrf.mxu0
      %v343 = vadd.f32 0.0, %v342
      %344 = vmatmul.f32.gmra.mxu0 %v224
      %v345 = vpop.f32.mrf.mxu0
      %v346 = vadd.f32 0.0, %v345
      %347 = vmatmul.f32.gmra.mxu0 %v225
      %v348 = vpop.f32.mrf.mxu0
      %v349 = vadd.f32 0.0, %v348
      %350 = vmatmul.f32.gmra.mxu0 %v226
      %v351 = vpop.f32.mrf.mxu0
      %v352 = vadd.f32 0.0, %v351
      %353 = vmatmul.f32.gmra.mxu0 %v227
      %v354 = vpop.f32.mrf.mxu0
      %v355 = vadd.f32 0.0, %v354
      %356 = vdwg.mxu0
      %v357 = vld [vmem:[%s188] sm:$0xff]
      %v358 = vld [vmem:[%s188 + $0x8] sm:$0xff]
      %v359 = vld [vmem:[%s188 + $0x10] sm:$0xff]
      %v360 = vld [vmem:[%s188 + $0x18] sm:$0xff]
      %v361 = vld [vmem:[%s188 + $0x20] sm:$0xff]
      %v362 = vld [vmem:[%s188 + $0x28] sm:$0xff]
      %v363 = vld [vmem:[%s188 + $0x30] sm:$0xff]
      %v364 = vld [vmem:[%s188 + $0x38] sm:$0xff]
      %v365 = vld [vmem:[%s188 + $0x40] sm:$0xff]
      %v366 = vld [vmem:[%s188 + $0x48] sm:$0xff]
      %v367 = vld [vmem:[%s188 + $0x50] sm:$0xff]
      %v368 = vld [vmem:[%s188 + $0x58] sm:$0xff]
      %v369 = vld [vmem:[%s188 + $0x60] sm:$0xff]
      %v370 = vld [vmem:[%s188 + $0x68] sm:$0xff]
      %v371 = vld [vmem:[%s188 + $0x70] sm:$0xff]
      %v372 = vld [vmem:[%s188 + $0x78] sm:$0xff]
      %v373 = vld [vmem:[%s188 + $0x80] sm:$0xff]
      %v374 = vld [vmem:[%s188 + $0x88] sm:$0xff]
      %v375 = vld [vmem:[%s188 + $0x90] sm:$0xff]
      %v376 = vld [vmem:[%s188 + $0x98] sm:$0xff]
      %v377 = vld [vmem:[%s188 + $0xa0] sm:$0xff]
      %v378 = vld [vmem:[%s188 + $0xa8] sm:$0xff]
      %v379 = vld [vmem:[%s188 + $0xb0] sm:$0xff]
      %v380 = vld [vmem:[%s188 + $0xb8] sm:$0xff]
      %v381 = vld [vmem:[%s188 + $0xc0] sm:$0xff]
      %v382 = vld [vmem:[%s188 + $0xc8] sm:$0xff]
      %v383 = vld [vmem:[%s188 + $0xd0] sm:$0xff]
      %v384 = vld [vmem:[%s188 + $0xd8] sm:$0xff]
      %v385 = vld [vmem:[%s188 + $0xe0] sm:$0xff]
      %v386 = vld [vmem:[%s188 + $0xe8] sm:$0xff]
      %v387 = vld [vmem:[%s188 + $0xf0] sm:$0xff]
      %v388 = vld [vmem:[%s188 + $0xf8] sm:$0xff]
      %390 = vset.pattern.permute.xlu0 0
      %391 = vperm.xlu0 %390, %v357
      %v392 = vpop.permute.xlu0 %391
      %395 = vset.pattern.permute.xlu0 0
      %396 = vperm.xlu0 %395, %v358
      %v397 = vpop.permute.xlu0 %396
      %400 = vset.pattern.permute.xlu0 0
      %401 = vperm.xlu0 %400, %v359
      %v402 = vpop.permute.xlu0 %401
      %405 = vset.pattern.permute.xlu0 0
      %406 = vperm.xlu0 %405, %v360
      %v407 = vpop.permute.xlu0 %406
      %410 = vset.pattern.permute.xlu0 0
      %411 = vperm.xlu0 %410, %v361
      %v412 = vpop.permute.xlu0 %411
      %415 = vset.pattern.permute.xlu0 0
      %416 = vperm.xlu0 %415, %v362
      %v417 = vpop.permute.xlu0 %416
      %420 = vset.pattern.permute.xlu0 0
      %421 = vperm.xlu0 %420, %v363
      %v422 = vpop.permute.xlu0 %421
      %425 = vset.pattern.permute.xlu0 0
      %426 = vperm.xlu0 %425, %v364
      %v427 = vpop.permute.xlu0 %426
      %430 = vset.pattern.permute.xlu0 0
      %431 = vperm.xlu0 %430, %v365
      %v432 = vpop.permute.xlu0 %431
      %435 = vset.pattern.permute.xlu0 0
      %436 = vperm.xlu0 %435, %v366
      %v437 = vpop.permute.xlu0 %436
      %440 = vset.pattern.permute.xlu0 0
      %441 = vperm.xlu0 %440, %v367
      %v442 = vpop.permute.xlu0 %441
      %445 = vset.pattern.permute.xlu0 0
      %446 = vperm.xlu0 %445, %v368
      %v447 = vpop.permute.xlu0 %446
      %450 = vset.pattern.permute.xlu0 0
      %451 = vperm.xlu0 %450, %v369
      %v452 = vpop.permute.xlu0 %451
      %455 = vset.pattern.permute.xlu0 0
      %456 = vperm.xlu0 %455, %v370
      %v457 = vpop.permute.xlu0 %456
      %460 = vset.pattern.permute.xlu0 0
      %461 = vperm.xlu0 %460, %v371
      %v462 = vpop.permute.xlu0 %461
      %465 = vset.pattern.permute.xlu0 0
      %466 = vperm.xlu0 %465, %v372
      %v467 = vpop.permute.xlu0 %466
      %470 = vset.pattern.permute.xlu0 0
      %471 = vperm.xlu0 %470, %v373
      %v472 = vpop.permute.xlu0 %471
      %475 = vset.pattern.permute.xlu0 0
      %476 = vperm.xlu0 %475, %v374
      %v477 = vpop.permute.xlu0 %476
      %480 = vset.pattern.permute.xlu0 0
      %481 = vperm.xlu0 %480, %v375
      %v482 = vpop.permute.xlu0 %481
      %485 = vset.pattern.permute.xlu0 0
      %486 = vperm.xlu0 %485, %v376
      %v487 = vpop.permute.xlu0 %486
      %490 = vset.pattern.permute.xlu0 0
      %491 = vperm.xlu0 %490, %v377
      %v492 = vpop.permute.xlu0 %491
      %495 = vset.pattern.permute.xlu0 0
      %496 = vperm.xlu0 %495, %v378
      %v497 = vpop.permute.xlu0 %496
      %500 = vset.pattern.permute.xlu0 0
      %501 = vperm.xlu0 %500, %v379
      %v502 = vpop.permute.xlu0 %501
      %505 = vset.pattern.permute.xlu0 0
      %506 = vperm.xlu0 %505, %v380
      %v507 = vpop.permute.xlu0 %506
      %510 = vset.pattern.permute.xlu0 0
      %511 = vperm.xlu0 %510, %v381
      %v512 = vpop.permute.xlu0 %511
      %515 = vset.pattern.permute.xlu0 0
      %516 = vperm.xlu0 %515, %v382
      %v517 = vpop.permute.xlu0 %516
      %520 = vset.pattern.permute.xlu0 0
      %521 = vperm.xlu0 %520, %v383
      %v522 = vpop.permute.xlu0 %521
      %525 = vset.pattern.permute.xlu0 0
      %526 = vperm.xlu0 %525, %v384
      %v527 = vpop.permute.xlu0 %526
      %530 = vset.pattern.permute.xlu0 0
      %531 = vperm.xlu0 %530, %v385
      %v532 = vpop.permute.xlu0 %531
      %535 = vset.pattern.permute.xlu0 0
      %536 = vperm.xlu0 %535, %v386
      %v537 = vpop.permute.xlu0 %536
      %540 = vset.pattern.permute.xlu0 0
      %541 = vperm.xlu0 %540, %v387
      %v542 = vpop.permute.xlu0 %541
      %545 = vset.pattern.permute.xlu0 0
      %546 = vperm.xlu0 %545, %v388
      %v547 = vpop.permute.xlu0 %546
      %v549 = vmul.f32 %v392, %v262
      %v550 = vmul.f32 %v397, %v265
      %v551 = vmul.f32 %v402, %v268
      %v552 = vmul.f32 %v407, %v271
      %v553 = vmul.f32 %v412, %v274
      %v554 = vmul.f32 %v417, %v277
      %v555 = vmul.f32 %v422, %v280
      %v556 = vmul.f32 %v427, %v283
      %v557 = vmul.f32 %v432, %v286
      %v558 = vmul.f32 %v437, %v289
      %v559 = vmul.f32 %v442, %v292
      %v560 = vmul.f32 %v447, %v295
      %v561 = vmul.f32 %v452, %v298
      %v562 = vmul.f32 %v457, %v301
      %v563 = vmul.f32 %v462, %v304
      %v564 = vmul.f32 %v467, %v307
      %v565 = vmul.f32 %v472, %v310
      %v566 = vmul.f32 %v477, %v313
      %v567 = vmul.f32 %v482, %v316
      %v568 = vmul.f32 %v487, %v319
      %v569 = vmul.f32 %v492, %v322
      %v570 = vmul.f32 %v497, %v325
      %v571 = vmul.f32 %v502, %v328
      %v572 = vmul.f32 %v507, %v331
      %v573 = vmul.f32 %v512, %v334
      %v574 = vmul.f32 %v517, %v337
      %v575 = vmul.f32 %v522, %v340
      %v576 = vmul.f32 %v527, %v343
      %v577 = vmul.f32 %v532, %v346
      %v578 = vmul.f32 %v537, %v349
      %v579 = vmul.f32 %v542, %v352
      %v580 = vmul.f32 %v547, %v355
      %v581 = vpack.c.bf16 %v549, %v549
      %v582 = vpack.c.bf16 %v550, %v550
      %v583 = vpack.c.bf16 %v551, %v551
      %v584 = vpack.c.bf16 %v552, %v552
      %v585 = vpack.c.bf16 %v553, %v553
      %v586 = vpack.c.bf16 %v554, %v554
      %v587 = vpack.c.bf16 %v555, %v555
      %v588 = vpack.c.bf16 %v556, %v556
      %v589 = vpack.c.bf16 %v557, %v557
      %v590 = vpack.c.bf16 %v558, %v558
      %v591 = vpack.c.bf16 %v559, %v559
      %v592 = vpack.c.bf16 %v560, %v560
      %v593 = vpack.c.bf16 %v561, %v561
      %v594 = vpack.c.bf16 %v562, %v562
      %v595 = vpack.c.bf16 %v563, %v563
      %v596 = vpack.c.bf16 %v564, %v564
      %v597 = vpack.c.bf16 %v565, %v565
      %v598 = vpack.c.bf16 %v566, %v566
      %v599 = vpack.c.bf16 %v567, %v567
      %v600 = vpack.c.bf16 %v568, %v568
      %v601 = vpack.c.bf16 %v569, %v569
      %v602 = vpack.c.bf16 %v570, %v570
      %v603 = vpack.c.bf16 %v571, %v571
      %v604 = vpack.c.bf16 %v572, %v572
      %v605 = vpack.c.bf16 %v573, %v573
      %v606 = vpack.c.bf16 %v574, %v574
      %v607 = vpack.c.bf16 %v575, %v575
      %v608 = vpack.c.bf16 %v576, %v576
      %v609 = vpack.c.bf16 %v577, %v577
      %v610 = vpack.c.bf16 %v578, %v578
      %v611 = vpack.c.bf16 %v579, %v579
      %v612 = vpack.c.bf16 %v580, %v580
      %613 = vst [vmem:[%s194] sm:$0xf] %v581
      %614 = vst [vmem:[%s194 + $0x4] sm:$0xf] %v582
      %615 = vst [vmem:[%s194 + $0x8] sm:$0xf] %v583
      %616 = vst [vmem:[%s194 + $0xc] sm:$0xf] %v584
      %617 = vst [vmem:[%s194 + $0x10] sm:$0xf] %v585
      %618 = vst [vmem:[%s194 + $0x14] sm:$0xf] %v586
      %619 = vst [vmem:[%s194 + $0x18] sm:$0xf] %v587
      %620 = vst [vmem:[%s194 + $0x1c] sm:$0xf] %v588
      %621 = vst [vmem:[%s194 + $0x20] sm:$0xf] %v589
      %622 = vst [vmem:[%s194 + $0x24] sm:$0xf] %v590
      %623 = vst [vmem:[%s194 + $0x28] sm:$0xf] %v591
      %624 = vst [vmem:[%s194 + $0x2c] sm:$0xf] %v592
      %625 = vst [vmem:[%s194 + $0x30] sm:$0xf] %v593
      %626 = vst [vmem:[%s194 + $0x34] sm:$0xf] %v594
      %627 = vst [vmem:[%s194 + $0x38] sm:$0xf] %v595
      %628 = vst [vmem:[%s194 + $0x3c] sm:$0xf] %v596
      %629 = vst [vmem:[%s194 + $0x40] sm:$0xf] %v597
      %630 = vst [vmem:[%s194 + $0x44] sm:$0xf] %v598
      %631 = vst [vmem:[%s194 + $0x48] sm:$0xf] %v599
      %632 = vst [vmem:[%s194 + $0x4c] sm:$0xf] %v600
      %633 = vst [vmem:[%s194 + $0x50] sm:$0xf] %v601
      %634 = vst [vmem:[%s194 + $0x54] sm:$0xf] %v602
      %635 = vst [vmem:[%s194 + $0x58] sm:$0xf] %v603
      %636 = vst [vmem:[%s194 + $0x5c] sm:$0xf] %v604
      %637 = vst [vmem:[%s194 + $0x60] sm:$0xf] %v605
      %638 = vst [vmem:[%s194 + $0x64] sm:$0xf] %v606
      %639 = vst [vmem:[%s194 + $0x68] sm:$0xf] %v607
      %640 = vst [vmem:[%s194 + $0x6c] sm:$0xf] %v608
      %641 = vst [vmem:[%s194 + $0x70] sm:$0xf] %v609
      %642 = vst [vmem:[%s194 + $0x74] sm:$0xf] %v610
      %643 = vst [vmem:[%s194 + $0x78] sm:$0xf] %v611
      %644 = vst [vmem:[%s194 + $0x7c] sm:$0xf] %v612
      %s645 = smul.u32 32, %s14
      %p646 = scmp.lt.s32.totalorder %s645, 63
      %s647 = scalar_select %p646, %s645, 63
      %s648 = smul.addr %s647, 4
      %s649 = scalar_lea.vmem %s3, %s648
      // Predicated region
      $region33: #{gcn_conv.2} parent=31 // pred_check
        %p650 = pneg %p105
      $region34: #{gcn_conv.2} parent=31 // pred_check_branch
        %652 = sbr.rel (%p650) target = $region36
      $region35: #{gcn_conv.2} parent=31 // pred_region
        %s653 = smul.u32 32, %s14
      $region36: #{gcn_conv.2} parent=31 // pred_fallthru
        _
    $region32: #{gcn_conv.2} parent=5 // pred_fallthru
      _
    %p654 = scmp.le.s32.totalorder 2, %s9
    // Predicated region
    $region37: #{gcn_conv.2} parent=5 // pred_check
      %p655 = pneg %p654
    $region38: #{gcn_conv.2} parent=5 // pred_check_branch
      %657 = sbr.rel (%p655) target = $region40
    $region39: #{gcn_conv.2} parent=5 // pred_region
      %s658 = ssub.s32 %s9, 2
      // Predicated region
      $region41: #{gcn_conv.2} parent=39 // pred_check
        %p659 = pneg %p111
      $region42: #{gcn_conv.2} parent=39 // pred_check_branch
        %661 = sbr.rel (%p659) target = $region44
      $region43: #{gcn_conv.2} parent=39 // pred_region
        %s662 = smul.u32 32, %s15
        %p663 = scmp.lt.s32.totalorder %s662, 63
        %s664 = scalar_select %p663, %s662, 63
        %s665 = smul.addr %s664, 4
        %s666 = scalar_lea.vmem %s3, %s665
      $region44: #{gcn_conv.2} parent=39 // pred_fallthru
        _
    $region40: #{gcn_conv.2} parent=5 // pred_fallthru
      _
  $region6: #{gcn_conv.2} parent=0 // loop_footer
    %s13 = sadd.s32 1, %s9
  $region7: #{gcn_conv.2} parent=0 // loop_footer_branch
    %8 = sbr.rel target = $region3
  $region8: #{gcn_conv.2} parent=0 // loop_exit
    _

// kernel: gcn_conv.3
$region0: #{gcn_conv.3}
  #allocation0 [shape = 'u32[]', space=smem, size = 0x4, offset = 0x4, fixed_abs, tag = 'smem constant byte address 0x4 - core index']
  #allocation1 [shape = 'u32[72,128]{1,0:T(1,128)}', space=vmem, size = 0x9000, scoped, tag = 'internal scratch']
  #allocation2 [shape = 'f32[256,128]{1,0:T(8,128)}', space=vmem, size = 0x20000, scoped, tag = 'scratch operand']
  %s0 = inlined_call_operand.vmem [shape: bf16[512,512], index: 0, kind: input, shape index: {}]
  %s1 = inlined_call_operand.vmem [shape: bf16[512,128], index: 1, kind: input, shape index: {}]
  %s2 = inlined_call_operand.vmem [shape: f32[512,1], index: 2, kind: input, shape index: {}]
  %s3 = inlined_call_operand.vmem [shape: f32[1,128], index: 3, kind: input, shape index: {}]
  %s4 = inlined_call_operand.vmem [shape: f32[512,128], index: 4, kind: output, shape index: {}]
  %s5 = sld [smem:[#allocation0]]
  $region57: #{gcn_conv.3} parent=0
    _
  %s7 = ssub.s32 1, %s5
  %s8 = scalar_select 0, %s7, %s5
  loop: start=0, step=1, limit=4
  $region2: #{gcn_conv.3} parent=0 // loop_pre_header
    _
  $region3: #{gcn_conv.3} parent=0 // loop_header
    %s10 = sphi 0, %s14
    %p11 = scmp.ge.s32.totalorder %s10, 4
    %s17 = sphi 0, %s29
    %s18 = sphi 0, %s25
    %s19 = sphi 0, %s17
    %s20 = sphi 0, %s18
    %s21 = sphi 0, %s19
    %s22 = sphi 0, %s20
    %s34 = sphi 0, %s36
    %s37 = sphi 0, %s34
    %s38 = sphi 0, %s37
    %s54 = sphi 0, %s38
    %s60 = sphi 0, %s62
    %s63 = sphi 0, %s60
    %s64 = sphi 0, %s63
    %s80 = sphi 0, %s64
    %s86 = sphi 0, %s88
    %s89 = sphi 0, %s86
    %s90 = sphi 0, %s89
    %s106 = sphi 0, %s90
    %s110 = sphi 0, %s110
    %s112 = sphi 0, %s110
    %s113 = sphi 0, %s112
    %s127 = sphi 0, %s113
    %s133 = sphi 0, %s135
    %s136 = sphi 0, %s133
    %s137 = sphi 0, %s136
    %s153 = sphi 0, %s137
  $region4: #{gcn_conv.3} parent=0 // loop_header_branch
    %13 = sbr.rel (%p11) target = $region8
  $region5: #{gcn_conv.3} parent=0 // loop_body
    %s15 = ssub.s32 %s10, 1
    %s16 = ssub.s32 %s10, 2
    %s23 = sadd.s32 1, %s18
    %p24 = scmp.ge.s32.totalorder %s23, 1
    %s25 = scalar_select %p24, 0, %s23
    %s26 = sadd.s32 1, %s17
    %s27 = scalar_select %p24, %s26, %s17
    %p28 = scmp.ge.s32.totalorder %s27, 2
    %s29 = scalar_select %p28, 0, %s27
    %s30 = ssub.s32 %s17, %s29
    %s31 = ssub.s32 %s18, %s25
    %s32 = sor.u32 %s30, %s31
    %p33 = scmp.eq.s32.totalorder %s32, 0
    %s35 = sadd.s32 %s34, 1
    %s36 = scalar_select %p33, %s34, %s35
    %p39 = pneg %p33
    %p40 = scmp.eq.s32.totalorder %s10, 1
    %p41 = por %p39, %p40
    %p42 = scmp.ne.s32.totalorder %s34, %s37
    %p43 = scmp.eq.s32.totalorder %s10, 0
    %p44 = por %p42, %p43
    %p45 = scmp.ne.s32.totalorder %s34, %s37
    %p46 = scmp.eq.s32.totalorder %s15, 1
    %p47 = por %p45, %p46
    %p48 = scmp.ne.s32.totalorder %s37, %s38
    %p49 = scmp.eq.s32.totalorder %s15, 0
    %p50 = por %p48, %p49
    %p51 = scmp.ne.s32.totalorder %s37, %s38
    %p52 = scmp.eq.s32.totalorder %s16, 1
    %p53 = por %p51, %p52
    %p55 = scmp.ne.s32.totalorder %s38, %s54
    %p56 = scmp.eq.s32.totalorder %s16, 0
    %p57 = por %p55, %p56
    %s58 = ssub.s32 %s18, %s25
    %p59 = scmp.eq.s32.totalorder %s58, 0
    %s61 = sadd.s32 %s60, 1
    %s62 = scalar_select %p59, %s60, %s61
    %p65 = pneg %p59
    %p66 = scmp.eq.s32.totalorder %s10, 1
    %p67 = por %p65, %p66
    %p68 = scmp.ne.s32.totalorder %s60, %s63
    %p69 = scmp.eq.s32.totalorder %s10, 0
    %p70 = por %p68, %p69
    %p71 = scmp.ne.s32.totalorder %s60, %s63
    %p72 = scmp.eq.s32.totalorder %s15, 1
    %p73 = por %p71, %p72
    %p74 = scmp.ne.s32.totalorder %s63, %s64
    %p75 = scmp.eq.s32.totalorder %s15, 0
    %p76 = por %p74, %p75
    %p77 = scmp.ne.s32.totalorder %s63, %s64
    %p78 = scmp.eq.s32.totalorder %s16, 1
    %p79 = por %p77, %p78
    %p81 = scmp.ne.s32.totalorder %s64, %s80
    %p82 = scmp.eq.s32.totalorder %s16, 0
    %p83 = por %p81, %p82
    %s84 = ssub.s32 %s17, %s29
    %p85 = scmp.eq.s32.totalorder %s84, 0
    %s87 = sadd.s32 %s86, 1
    %s88 = scalar_select %p85, %s86, %s87
    %p91 = pneg %p85
    %p92 = scmp.eq.s32.totalorder %s10, 1
    %p93 = por %p91, %p92
    %p94 = scmp.ne.s32.totalorder %s86, %s89
    %p95 = scmp.eq.s32.totalorder %s10, 0
    %p96 = por %p94, %p95
    %p97 = scmp.ne.s32.totalorder %s86, %s89
    %p98 = scmp.eq.s32.totalorder %s15, 1
    %p99 = por %p97, %p98
    %p100 = scmp.ne.s32.totalorder %s89, %s90
    %p101 = scmp.eq.s32.totalorder %s15, 0
    %p102 = por %p100, %p101
    %p103 = scmp.ne.s32.totalorder %s89, %s90
    %p104 = scmp.eq.s32.totalorder %s16, 1
    %p105 = por %p103, %p104
    %p107 = scmp.ne.s32.totalorder %s90, %s106
    %p108 = scmp.eq.s32.totalorder %s16, 0
    %p109 = por %p107, %p108
    %s111 = sadd.s32 %s110, 1
    %p114 = scmp.eq.s32.totalorder %s10, 1
    %p115 = scmp.ne.s32.totalorder %s110, %s112
    %p116 = scmp.eq.s32.totalorder %s10, 0
    %p117 = por %p115, %p116
    %p118 = scmp.ne.s32.totalorder %s110, %s112
    %p119 = scmp.eq.s32.totalorder %s15, 1
    %p120 = por %p118, %p119
    %p121 = scmp.ne.s32.totalorder %s112, %s113
    %p122 = scmp.eq.s32.totalorder %s15, 0
    %p123 = por %p121, %p122
    %p124 = scmp.ne.s32.totalorder %s112, %s113
    %p125 = scmp.eq.s32.totalorder %s16, 1
    %p126 = por %p124, %p125
    %p128 = scmp.ne.s32.totalorder %s113, %s127
    %p129 = scmp.eq.s32.totalorder %s16, 0
    %p130 = por %p128, %p129
    %s131 = ssub.s32 %s17, %s29
    %p132 = scmp.eq.s32.totalorder %s131, 0
    %s134 = sadd.s32 %s133, 1
    %s135 = scalar_select %p132, %s133, %s134
    %p138 = pneg %p132
    %p139 = scmp.eq.s32.totalorder %s10, 1
    %p140 = por %p138, %p139
    %p141 = scmp.ne.s32.totalorder %s133, %s136
    %p142 = scmp.eq.s32.totalorder %s10, 0
    %p143 = por %p141, %p142
    %p144 = scmp.ne.s32.totalorder %s133, %s136
    %p145 = scmp.eq.s32.totalorder %s15, 1
    %p146 = por %p144, %p145
    %p147 = scmp.ne.s32.totalorder %s136, %s137
    %p148 = scmp.eq.s32.totalorder %s15, 0
    %p149 = por %p147, %p148
    %p150 = scmp.ne.s32.totalorder %s136, %s137
    %p151 = scmp.eq.s32.totalorder %s16, 1
    %p152 = por %p150, %p151
    %p154 = scmp.ne.s32.totalorder %s137, %s153
    %p155 = scmp.eq.s32.totalorder %s16, 0
    %p156 = por %p154, %p155
    %p157 = scmp.le.s32.totalorder 1, %s10
    %p158 = scmp.lt.s32.totalorder %s10, 3
    %p159 = pnand %p157, %p158
    %p160 = pneg %p159
    // Predicated region
    $region9: #{gcn_conv.3} parent=5 // pred_check
      _
    $region10: #{gcn_conv.3} parent=5 // pred_check_branch
      %162 = sbr.rel (%p159) target = $region12
    $region11: #{gcn_conv.3} parent=5 // pred_region
      %s163 = ssub.s32 %s10, 1
      // Predicated region
      $region13: #{gcn_conv.3} parent=11 // pred_check
        %p164 = pneg %p76
      $region14: #{gcn_conv.3} parent=11 // pred_check_branch
        %166 = sbr.rel (%p164) target = $region16
      $region15: #{gcn_conv.3} parent=11 // pred_region
        %s167 = smul.u32 64, %s20
        %p168 = scmp.lt.s32.totalorder %s167, 63
        %s169 = scalar_select %p168, %s167, 63
        %s170 = smul.addr %s169, 4
        %s171 = scalar_lea.vmem %s1, %s170
        %s172 = smul.u32 64, %s20
      $region16: #{gcn_conv.3} parent=11 // pred_fallthru
        _
      // Predicated region
      $region17: #{gcn_conv.3} parent=11 // pred_check
        %p173 = pneg %p123
      $region18: #{gcn_conv.3} parent=11 // pred_check_branch
        %175 = sbr.rel (%p173) target = $region20
      $region19: #{gcn_conv.3} parent=11 // pred_region
        _
      $region20: #{gcn_conv.3} parent=11 // pred_fallthru
        _
    $region12: #{gcn_conv.3} parent=5 // pred_fallthru
      _
    %p176 = scmp.lt.s32.totalorder %s10, 2
    // Predicated region
    $region21: #{gcn_conv.3} parent=5 // pred_check
      %p177 = pneg %p176
    $region22: #{gcn_conv.3} parent=5 // pred_check_branch
      %179 = sbr.rel (%p177) target = $region24
    $region23: #{gcn_conv.3} parent=5 // pred_region
      // Predicated region
      $region25: #{gcn_conv.3} parent=23 // pred_check
        %p180 = pneg %p44
      $region26: #{gcn_conv.3} parent=23 // pred_check_branch
        %182 = sbr.rel (%p180) target = $region28
      $region27: #{gcn_conv.3} parent=23 // pred_region
        %s183 = smul.u32 32, %s17
        %s184 = smul.u32 4, %s18
        %p185 = scmp.lt.s32.totalorder %s183, 63
        %s186 = scalar_select %p185, %s183, 63
        %p187 = scmp.lt.s32.totalorder %s184, 3
        %s188 = scalar_select %p187, %s184, 3
        %s189 = smul.addr %s186, 4
        %s190 = sadd.s32 %s188, %s189
        %s191 = smul.addr %s190, 4
        %s192 = scalar_lea.vmem %s0, %s191
        %s193 = smul.u32 32, %s17
        %s194 = smul.u32 4, %s18
      $region28: #{gcn_conv.3} parent=23 // pred_fallthru
        _
      // Predicated region
      $region29: #{gcn_conv.3} parent=23 // pred_check
        %p195 = pneg %p96
      $region30: #{gcn_conv.3} parent=23 // pred_check_branch
        %197 = sbr.rel (%p195) target = $region32
      $region31: #{gcn_conv.3} parent=23 // pred_region
        %s198 = smul.u32 32, %s17
        %p199 = scmp.lt.s32.totalorder %s198, 63
        %s200 = scalar_select %p199, %s198, 63
        %s201 = smul.addr %s200, 8
        %s202 = scalar_lea.vmem %s2, %s201
        %s203 = smul.u32 32, %s17
      $region32: #{gcn_conv.3} parent=23 // pred_fallthru
        _
    $region24: #{gcn_conv.3} parent=5 // pred_fallthru
      _
    %p204 = scmp.le.s32.totalorder 1, %s10
    %p205 = scmp.lt.s32.totalorder %s10, 3
    %p206 = pnand %p204, %p205
    %p207 = pneg %p206
    // Predicated region
    $region33: #{gcn_conv.3} parent=5 // pred_check
      _
    $region34: #{gcn_conv.3} parent=5 // pred_check_branch
      %209 = sbr.rel (%p206) target = $region36
    $region35: #{gcn_conv.3} parent=5 // pred_region
      %s210 = ssub.s32 %s10, 1
      %s211 = smul.u32 32, %s19
      %s212 = smul.u32 4, %s20
      %p213 = scmp.lt.s32.totalorder %s211, 63
      %s214 = scalar_select %p213, %s211, 63
      %p215 = scmp.lt.s32.totalorder %s212, 3
      %s216 = scalar_select %p215, %s212, 3
      %s217 = smul.addr %s214, 4
      %s218 = sadd.s32 %s216, %s217
      %s219 = smul.addr %s218, 4
      %s220 = scalar_lea.vmem %s0, %s219
      %p221 = pneg %p50
      %p222 = pneg %p47
      %s223 = smul.u32 64, %s20
      %p224 = scmp.lt.s32.totalorder %s223, 63
      %s225 = scalar_select %p224, %s223, 63
      %s226 = smul.addr %s225, 4
      %s227 = scalar_lea.vmem %s1, %s226
      %p228 = pneg %p76
      %p229 = pneg %p73
      %s230 = smul.u32 32, %s19
      %p231 = scmp.lt.s32.totalorder %s230, 63
      %s232 = scalar_select %p231, %s230, 63
      %s233 = smul.addr %s232, 8
      %s234 = scalar_lea.vmem %s2, %s233
      %p235 = pneg %p102
      %p236 = pneg %p99
      %p237 = pneg %p123
      %p238 = pneg %p120
      %p239 = pneg %p149
      %p240 = pneg %p146
      %s241 = smul.u32 32, %s19
      %p242 = scmp.lt.s32.totalorder %s241, 63
      %s243 = scalar_select %p242, %s241, 63
      %s244 = smul.addr %s243, 8
      %s245 = scalar_lea.vmem %s4, %s244
      %s246 = smul.u32 32, %s19
      %s247 = smul.u32 4, %s20
      %p248 = scmp.lt.s32.totalorder %s246, 63
      %s249 = scalar_select %p248, %s246, 63
      %p250 = scmp.lt.s32.totalorder %s247, 3
      %s251 = scalar_select %p250, %s247, 3
      %s252 = smul.addr %s249, 4
      %s253 = sadd.s32 %s251, %s252
      %s254 = smul.addr %s253, 4
      %s255 = scalar_lea.vmem %s0, %s254
      %s256 = smul.u32 32, %s19
      %s257 = smul.u32 4, %s20
      %s258 = smul.u32 64, %s20
      %p259 = scmp.lt.s32.totalorder %s258, 63
      %s260 = scalar_select %p259, %s258, 63
      %s261 = smul.addr %s260, 4
      %s262 = scalar_lea.vmem %s1, %s261
      %s263 = smul.u32 64, %s20
      %s264 = smul.u32 32, %s19
      %p265 = scmp.lt.s32.totalorder %s264, 63
      %s266 = scalar_select %p265, %s264, 63
      %s267 = smul.addr %s266, 8
      %s268 = scalar_lea.vmem %s2, %s267
      %s269 = smul.u32 32, %s19
      %s270 = smul.u32 32, %s19
      %p271 = scmp.lt.s32.totalorder %s270, 63
      %s272 = scalar_select %p271, %s270, 63
      %s273 = smul.addr %s272, 8
      %s274 = scalar_lea.vmem %s4, %s273
      %s275 = smul.u32 32, %s19
      %p276 = scmp.eq.s32.totalorder %s20, 0
      // Predicated region
      $region37: #{gcn_conv.3} parent=35 // pred_check
        %p277 = pneg %p276
      $region38: #{gcn_conv.3} parent=35 // pred_check_branch
        %279 = sbr.rel (%p277) target = $region40
      $region39: #{gcn_conv.3} parent=35 // pred_region
        %280 = vst [vmem:[#allocation2] sm:$0xff] 0.0
        %281 = vst [vmem:[#allocation2 + $0x8] sm:$0xff] 0.0
        %282 = vst [vmem:[#allocation2 + $0x10] sm:$0xff] 0.0
        %283 = vst [vmem:[#allocation2 + $0x18] sm:$0xff] 0.0
        %284 = vst [vmem:[#allocation2 + $0x20] sm:$0xff] 0.0
        %285 = vst [vmem:[#allocation2 + $0x28] sm:$0xff] 0.0
        %286 = vst [vmem:[#allocation2 + $0x30] sm:$0xff] 0.0
        %287 = vst [vmem:[#allocation2 + $0x38] sm:$0xff] 0.0
        %288 = vst [vmem:[#allocation2 + $0x40] sm:$0xff] 0.0
        %289 = vst [vmem:[#allocation2 + $0x48] sm:$0xff] 0.0
        %290 = vst [vmem:[#allocation2 + $0x50] sm:$0xff] 0.0
        %291 = vst [vmem:[#allocation2 + $0x58] sm:$0xff] 0.0
        %292 = vst [vmem:[#allocation2 + $0x60] sm:$0xff] 0.0
        %293 = vst [vmem:[#allocation2 + $0x68] sm:$0xff] 0.0
        %294 = vst [vmem:[#allocation2 + $0x70] sm:$0xff] 0.0
        %295 = vst [vmem:[#allocation2 + $0x78] sm:$0xff] 0.0
        %296 = vst [vmem:[#allocation2 + $0x80] sm:$0xff] 0.0
        %297 = vst [vmem:[#allocation2 + $0x88] sm:$0xff] 0.0
        %298 = vst [vmem:[#allocation2 + $0x90] sm:$0xff] 0.0
        %299 = vst [vmem:[#allocation2 + $0x98] sm:$0xff] 0.0
        %300 = vst [vmem:[#allocation2 + $0xa0] sm:$0xff] 0.0
        %301 = vst [vmem:[#allocation2 + $0xa8] sm:$0xff] 0.0
        %302 = vst [vmem:[#allocation2 + $0xb0] sm:$0xff] 0.0
        %303 = vst [vmem:[#allocation2 + $0xb8] sm:$0xff] 0.0
        %304 = vst [vmem:[#allocation2 + $0xc0] sm:$0xff] 0.0
        %305 = vst [vmem:[#allocation2 + $0xc8] sm:$0xff] 0.0
        %306 = vst [vmem:[#allocation2 + $0xd0] sm:$0xff] 0.0
        %307 = vst [vmem:[#allocation2 + $0xd8] sm:$0xff] 0.0
        %308 = vst [vmem:[#allocation2 + $0xe0] sm:$0xff] 0.0
        %309 = vst [vmem:[#allocation2 + $0xe8] sm:$0xff] 0.0
        %310 = vst [vmem:[#allocation2 + $0xf0] sm:$0xff] 0.0
        %311 = vst [vmem:[#allocation2 + $0xf8] sm:$0xff] 0.0
      $region40: #{gcn_conv.3} parent=35 // pred_fallthru
        _
      %v312 = vld [vmem:[#allocation2] sm:$0xff]
      %v313 = vld [vmem:[#allocation2 + $0x8] sm:$0xff]
      %v314 = vld [vmem:[#allocation2 + $0x10] sm:$0xff]
      %v315 = vld [vmem:[#allocation2 + $0x18] sm:$0xff]
      %v316 = vld [vmem:[#allocation2 + $0x20] sm:$0xff]
      %v317 = vld [vmem:[#allocation2 + $0x28] sm:$0xff]
      %v318 = vld [vmem:[#allocation2 + $0x30] sm:$0xff]
      %v319 = vld [vmem:[#allocation2 + $0x38] sm:$0xff]
      %v320 = vld [vmem:[#allocation2 + $0x40] sm:$0xff]
      %v321 = vld [vmem:[#allocation2 + $0x48] sm:$0xff]
      %v322 = vld [vmem:[#allocation2 + $0x50] sm:$0xff]
      %v323 = vld [vmem:[#allocation2 + $0x58] sm:$0xff]
      %v324 = vld [vmem:[#allocation2 + $0x60] sm:$0xff]
      %v325 = vld [vmem:[#allocation2 + $0x68] sm:$0xff]
      %v326 = vld [vmem:[#allocation2 + $0x70] sm:$0xff]
      %v327 = vld [vmem:[#allocation2 + $0x78] sm:$0xff]
      %v328 = vld [vmem:[#allocation2 + $0x80] sm:$0xff]
      %v329 = vld [vmem:[#allocation2 + $0x88] sm:$0xff]
      %v330 = vld [vmem:[#allocation2 + $0x90] sm:$0xff]
      %v331 = vld [vmem:[#allocation2 + $0x98] sm:$0xff]
      %v332 = vld [vmem:[#allocation2 + $0xa0] sm:$0xff]
      %v333 = vld [vmem:[#allocation2 + $0xa8] sm:$0xff]
      %v334 = vld [vmem:[#allocation2 + $0xb0] sm:$0xff]
      %v335 = vld [vmem:[#allocation2 + $0xb8] sm:$0xff]
      %v336 = vld [vmem:[#allocation2 + $0xc0] sm:$0xff]
      %v337 = vld [vmem:[#allocation2 + $0xc8] sm:$0xff]
      %v338 = vld [vmem:[#allocation2 + $0xd0] sm:$0xff]
      %v339 = vld [vmem:[#allocation2 + $0xd8] sm:$0xff]
      %v340 = vld [vmem:[#allocation2 + $0xe0] sm:$0xff]
      %v341 = vld [vmem:[#allocation2 + $0xe8] sm:$0xff]
      %v342 = vld [vmem:[#allocation2 + $0xf0] sm:$0xff]
      %v343 = vld [vmem:[#allocation2 + $0xf8] sm:$0xff]
      %v344 = vld [vmem:[%s255] sm:$0xff]
      %v345 = vld [vmem:[%s255 + $0x8] sm:$0xff]
      %v346 = vld [vmem:[%s255 + $0x10] sm:$0xff]
      %v347 = vld [vmem:[%s255 + $0x18] sm:$0xff]
      %v348 = vld [vmem:[%s255 + $0x20] sm:$0xff]
      %v349 = vld [vmem:[%s255 + $0x28] sm:$0xff]
      %v350 = vld [vmem:[%s255 + $0x30] sm:$0xff]
      %v351 = vld [vmem:[%s255 + $0x38] sm:$0xff]
      %v352 = vld [vmem:[%s255 + $0x40] sm:$0xff]
      %v353 = vld [vmem:[%s255 + $0x48] sm:$0xff]
      %v354 = vld [vmem:[%s255 + $0x50] sm:$0xff]
      %v355 = vld [vmem:[%s255 + $0x58] sm:$0xff]
      %v356 = vld [vmem:[%s255 + $0x60] sm:$0xff]
      %v357 = vld [vmem:[%s255 + $0x68] sm:$0xff]
      %v358 = vld [vmem:[%s255 + $0x70] sm:$0xff]
      %v359 = vld [vmem:[%s255 + $0x78] sm:$0xff]
      %v360 = vld [vmem:[%s255 + $0x80] sm:$0xff]
      %v361 = vld [vmem:[%s255 + $0x88] sm:$0xff]
      %v362 = vld [vmem:[%s255 + $0x90] sm:$0xff]
      %v363 = vld [vmem:[%s255 + $0x98] sm:$0xff]
      %v364 = vld [vmem:[%s255 + $0xa0] sm:$0xff]
      %v365 = vld [vmem:[%s255 + $0xa8] sm:$0xff]
      %v366 = vld [vmem:[%s255 + $0xb0] sm:$0xff]
      %v367 = vld [vmem:[%s255 + $0xb8] sm:$0xff]
      %v368 = vld [vmem:[%s255 + $0xc0] sm:$0xff]
      %v369 = vld [vmem:[%s255 + $0xc8] sm:$0xff]
      %v370 = vld [vmem:[%s255 + $0xd0] sm:$0xff]
      %v371 = vld [vmem:[%s255 + $0xd8] sm:$0xff]
      %v372 = vld [vmem:[%s255 + $0xe0] sm:$0xff]
      %v373 = vld [vmem:[%s255 + $0xe8] sm:$0xff]
      %v374 = vld [vmem:[%s255 + $0xf0] sm:$0xff]
      %v375 = vld [vmem:[%s255 + $0xf8] sm:$0xff]
      %v376 = vld [vmem:[%s255 + $0x100] sm:$0xff]
      %v377 = vld [vmem:[%s255 + $0x108] sm:$0xff]
      %v378 = vld [vmem:[%s255 + $0x110] sm:$0xff]
      %v379 = vld [vmem:[%s255 + $0x118] sm:$0xff]
      %v380 = vld [vmem:[%s255 + $0x120] sm:$0xff]
      %v381 = vld [vmem:[%s255 + $0x128] sm:$0xff]
      %v382 = vld [vmem:[%s255 + $0x130] sm:$0xff]
      %v383 = vld [vmem:[%s255 + $0x138] sm:$0xff]
      %v384 = vld [vmem:[%s255 + $0x140] sm:$0xff]
      %v385 = vld [vmem:[%s255 + $0x148] sm:$0xff]
      %v386 = vld [vmem:[%s255 + $0x150] sm:$0xff]
      %v387 = vld [vmem:[%s255 + $0x158] sm:$0xff]
      %v388 = vld [vmem:[%s255 + $0x160] sm:$0xff]
      %v389 = vld [vmem:[%s255 + $0x168] sm:$0xff]
      %v390 = vld [vmem:[%s255 + $0x170] sm:$0xff]
      %v391 = vld [vmem:[%s255 + $0x178] sm:$0xff]
      %v392 = vld [vmem:[%s255 + $0x180] sm:$0xff]
      %v393 = vld [vmem:[%s255 + $0x188] sm:$0xff]
      %v394 = vld [vmem:[%s255 + $0x190] sm:$0xff]
      %v395 = vld [vmem:[%s255 + $0x198] sm:$0xff]
      %v396 = vld [vmem:[%s255 + $0x1a0] sm:$0xff]
      %v397 = vld [vmem:[%s255 + $0x1a8] sm:$0xff]
      %v398 = vld [vmem:[%s255 + $0x1b0] sm:$0xff]
      %v399 = vld [vmem:[%s255 + $0x1b8] sm:$0xff]
      %v400 = vld [vmem:[%s255 + $0x1c0] sm:$0xff]
      %v401 = vld [vmem:[%s255 + $0x1c8] sm:$0xff]
      %v402 = vld [vmem:[%s255 + $0x1d0] sm:$0xff]
      %v403 = vld [vmem:[%s255 + $0x1d8] sm:$0xff]
      %v404 = vld [vmem:[%s255 + $0x1e0] sm:$0xff]
      %v405 = vld [vmem:[%s255 + $0x1e8] sm:$0xff]
      %v406 = vld [vmem:[%s255 + $0x1f0] sm:$0xff]
      %v407 = vld [vmem:[%s255 + $0x1f8] sm:$0xff]
      %v408 = vld [vmem:[%s262] sm:$0xf]
      %v409 = vld [vmem:[%s262 + $0x4] sm:$0xf]
      %v410 = vld [vmem:[%s262 + $0x8] sm:$0xf]
      %v411 = vld [vmem:[%s262 + $0xc] sm:$0xf]
      %v412 = vld [vmem:[%s262 + $0x10] sm:$0xf]
      %v413 = vld [vmem:[%s262 + $0x14] sm:$0xf]
      %v414 = vld [vmem:[%s262 + $0x18] sm:$0xf]
      %v415 = vld [vmem:[%s262 + $0x1c] sm:$0xf]
      %v416 = vld [vmem:[%s262 + $0x20] sm:$0xf]
      %v417 = vld [vmem:[%s262 + $0x24] sm:$0xf]
      %v418 = vld [vmem:[%s262 + $0x28] sm:$0xf]
      %v419 = vld [vmem:[%s262 + $0x2c] sm:$0xf]
      %v420 = vld [vmem:[%s262 + $0x30] sm:$0xf]
      %v421 = vld [vmem:[%s262 + $0x34] sm:$0xf]
      %v422 = vld [vmem:[%s262 + $0x38] sm:$0xf]
      %v423 = vld [vmem:[%s262 + $0x3c] sm:$0xf]
      %v424 = vld [vmem:[%s262 + $0x40] sm:$0xf]
      %v425 = vld [vmem:[%s262 + $0x44] sm:$0xf]
      %v426 = vld [vmem:[%s262 + $0x48] sm:$0xf]
      %v427 = vld [vmem:[%s262 + $0x4c] sm:$0xf]
      %v428 = vld [vmem:[%s262 + $0x50] sm:$0xf]
      %v429 = vld [vmem:[%s262 + $0x54] sm:$0xf]
      %v430 = vld [vmem:[%s262 + $0x58] sm:$0xf]
      %v431 = vld [vmem:[%s262 + $0x5c] sm:$0xf]
      %v432 = vld [vmem:[%s262 + $0x60] sm:$0xf]
      %v433 = vld [vmem:[%s262 + $0x64] sm:$0xf]
      %v434 = vld [vmem:[%s262 + $0x68] sm:$0xf]
      %v435 = vld [vmem:[%s262 + $0x6c] sm:$0xf]
      %v436 = vld [vmem:[%s262 + $0x70] sm:$0xf]
      %v437 = vld [vmem:[%s262 + $0x74] sm:$0xf]
      %v438 = vld [vmem:[%s262 + $0x78] sm:$0xf]
      %v439 = vld [vmem:[%s262 + $0x7c] sm:$0xf]
      %v440 = vld [vmem:[%s262 + $0x80] sm:$0xf]
      %v441 = vld [vmem:[%s262 + $0x84] sm:$0xf]
      %v442 = vld [vmem:[%s262 + $0x88] sm:$0xf]
      %v443 = vld [vmem:[%s262 + $0x8c] sm:$0xf]
      %v444 = vld [vmem:[%s262 + $0x90] sm:$0xf]
      %v445 = vld [vmem:[%s262 + $0x94] sm:$0xf]
      %v446 = vld [vmem:[%s262 + $0x98] sm:$0xf]
      %v447 = vld [vmem:[%s262 + $0x9c] sm:$0xf]
      %v448 = vld [vmem:[%s262 + $0xa0] sm:$0xf]
      %v449 = vld [vmem:[%s262 + $0xa4] sm:$0xf]
      %v450 = vld [vmem:[%s262 + $0xa8] sm:$0xf]
      %v451 = vld [vmem:[%s262 + $0xac] sm:$0xf]
      %v452 = vld [vmem:[%s262 + $0xb0] sm:$0xf]
      %v453 = vld [vmem:[%s262 + $0xb4] sm:$0xf]
      %v454 = vld [vmem:[%s262 + $0xb8] sm:$0xf]
      %v455 = vld [vmem:[%s262 + $0xbc] sm:$0xf]
      %v456 = vld [vmem:[%s262 + $0xc0] sm:$0xf]
      %v457 = vld [vmem:[%s262 + $0xc4] sm:$0xf]
      %v458 = vld [vmem:[%s262 + $0xc8] sm:$0xf]
      %v459 = vld [vmem:[%s262 + $0xcc] sm:$0xf]
      %v460 = vld [vmem:[%s262 + $0xd0] sm:$0xf]
      %v461 = vld [vmem:[%s262 + $0xd4] sm:$0xf]
      %v462 = vld [vmem:[%s262 + $0xd8] sm:$0xf]
      %v463 = vld [vmem:[%s262 + $0xdc] sm:$0xf]
      %v464 = vld [vmem:[%s262 + $0xe0] sm:$0xf]
      %v465 = vld [vmem:[%s262 + $0xe4] sm:$0xf]
      %v466 = vld [vmem:[%s262 + $0xe8] sm:$0xf]
      %v467 = vld [vmem:[%s262 + $0xec] sm:$0xf]
      %v468 = vld [vmem:[%s262 + $0xf0] sm:$0xf]
      %v469 = vld [vmem:[%s262 + $0xf4] sm:$0xf]
      %v470 = vld [vmem:[%s262 + $0xf8] sm:$0xf]
      %v471 = vld [vmem:[%s262 + $0xfc] sm:$0xf]
      %v536 = vunpack.c.l.b16 %v344
      %v537 = vunpack.c.h.b16 %v344
      %v538 = vunpack.c.l.b16 %v345
      %v539 = vunpack.c.h.b16 %v345
      %v540 = vunpack.c.l.b16 %v346
      %v541 = vunpack.c.h.b16 %v346
      %v542 = vunpack.c.l.b16 %v347
      %v543 = vunpack.c.h.b16 %v347
      %v544 = vunpack.c.l.b16 %v348
      %v545 = vunpack.c.h.b16 %v348
      %v546 = vunpack.c.l.b16 %v349
      %v547 = vunpack.c.h.b16 %v349
      %v548 = vunpack.c.l.b16 %v350
      %v549 = vunpack.c.h.b16 %v350
      %v550 = vunpack.c.l.b16 %v351
      %v551 = vunpack.c.h.b16 %v351
      %v552 = vunpack.c.l.b16 %v352
      %v553 = vunpack.c.h.b16 %v352
      %v554 = vunpack.c.l.b16 %v353
      %v555 = vunpack.c.h.b16 %v353
      %v556 = vunpack.c.l.b16 %v354
      %v557 = vunpack.c.h.b16 %v354
      %v558 = vunpack.c.l.b16 %v355
      %v559 = vunpack.c.h.b16 %v355
      %v560 = vunpack.c.l.b16 %v356
      %v561 = vunpack.c.h.b16 %v356
      %v562 = vunpack.c.l.b16 %v357
      %v563 = vunpack.c.h.b16 %v357
      %v564 = vunpack.c.l.b16 %v358
      %v565 = vunpack.c.h.b16 %v358
      %v566 = vunpack.c.l.b16 %v359
      %v567 = vunpack.c.h.b16 %v359
      %v568 = vunpack.c.l.b16 %v360
      %v569 = vunpack.c.h.b16 %v360
      %v570 = vunpack.c.l.b16 %v361
      %v571 = vunpack.c.h.b16 %v361
      %v572 = vunpack.c.l.b16 %v362
      %v573 = vunpack.c.h.b16 %v362
      %v574 = vunpack.c.l.b16 %v363
      %v575 = vunpack.c.h.b16 %v363
      %v576 = vunpack.c.l.b16 %v364
      %v577 = vunpack.c.h.b16 %v364
      %v578 = vunpack.c.l.b16 %v365
      %v579 = vunpack.c.h.b16 %v365
      %v580 = vunpack.c.l.b16 %v366
      %v581 = vunpack.c.h.b16 %v366
      %v582 = vunpack.c.l.b16 %v367
      %v583 = vunpack.c.h.b16 %v367
      %v584 = vunpack.c.l.b16 %v368
      %v585 = vunpack.c.h.b16 %v368
      %v586 = vunpack.c.l.b16 %v369
      %v587 = vunpack.c.h.b16 %v369
      %v588 = vunpack.c.l.b16 %v370
      %v589 = vunpack.c.h.b16 %v370
      %v590 = vunpack.c.l.b16 %v371
      %v591 = vunpack.c.h.b16 %v371
      %v592 = vunpack.c.l.b16 %v372
      %v593 = vunpack.c.h.b16 %v372
      %v594 = vunpack.c.l.b16 %v373
      %v595 = vunpack.c.h.b16 %v373
      %v596 = vunpack.c.l.b16 %v374
      %v597 = vunpack.c.h.b16 %v374
      %v598 = vunpack.c.l.b16 %v375
      %v599 = vunpack.c.h.b16 %v375
      %v600 = vunpack.c.l.b16 %v376
      %v601 = vunpack.c.h.b16 %v376
      %v602 = vunpack.c.l.b16 %v377
      %v603 = vunpack.c.h.b16 %v377
      %v604 = vunpack.c.l.b16 %v378
      %v605 = vunpack.c.h.b16 %v378
      %v606 = vunpack.c.l.b16 %v379
      %v607 = vunpack.c.h.b16 %v379
      %v608 = vunpack.c.l.b16 %v380
      %v609 = vunpack.c.h.b16 %v380
      %v610 = vunpack.c.l.b16 %v381
      %v611 = vunpack.c.h.b16 %v381
      %v612 = vunpack.c.l.b16 %v382
      %v613 = vunpack.c.h.b16 %v382
      %v614 = vunpack.c.l.b16 %v383
      %v615 = vunpack.c.h.b16 %v383
      %v616 = vunpack.c.l.b16 %v384
      %v617 = vunpack.c.h.b16 %v384
      %v618 = vunpack.c.l.b16 %v385
      %v619 = vunpack.c.h.b16 %v385
      %v620 = vunpack.c.l.b16 %v386
      %v621 = vunpack.c.h.b16 %v386
      %v622 = vunpack.c.l.b16 %v387
      %v623 = vunpack.c.h.b16 %v387
      %v624 = vunpack.c.l.b16 %v388
      %v625 = vunpack.c.h.b16 %v388
      %v626 = vunpack.c.l.b16 %v389
      %v627 = vunpack.c.h.b16 %v389
      %v628 = vunpack.c.l.b16 %v390
      %v629 = vunpack.c.h.b16 %v390
      %v630 = vunpack.c.l.b16 %v391
      %v631 = vunpack.c.h.b16 %v391
      %v632 = vunpack.c.l.b16 %v392
      %v633 = vunpack.c.h.b16 %v392
      %v634 = vunpack.c.l.b16 %v393
      %v635 = vunpack.c.h.b16 %v393
      %v636 = vunpack.c.l.b16 %v394
      %v637 = vunpack.c.h.b16 %v394
      %v638 = vunpack.c.l.b16 %v395
      %v639 = vunpack.c.h.b16 %v395
      %v640 = vunpack.c.l.b16 %v396
      %v641 = vunpack.c.h.b16 %v396
      %v642 = vunpack.c.l.b16 %v397
      %v643 = vunpack.c.h.b16 %v397
      %v644 = vunpack.c.l.b16 %v398
      %v645 = vunpack.c.h.b16 %v398
      %v646 = vunpack.c.l.b16 %v399
      %v647 = vunpack.c.h.b16 %v399
      %v648 = vunpack.c.l.b16 %v400
      %v649 = vunpack.c.h.b16 %v400
      %v650 = vunpack.c.l.b16 %v401
      %v651 = vunpack.c.h.b16 %v401
      %v652 = vunpack.c.l.b16 %v402
      %v653 = vunpack.c.h.b16 %v402
      %v654 = vunpack.c.l.b16 %v403
      %v655 = vunpack.c.h.b16 %v403
      %v656 = vunpack.c.l.b16 %v404
      %v657 = vunpack.c.h.b16 %v404
      %v658 = vunpack.c.l.b16 %v405
      %v659 = vunpack.c.h.b16 %v405
      %v660 = vunpack.c.l.b16 %v406
      %v661 = vunpack.c.h.b16 %v406
      %v662 = vunpack.c.l.b16 %v407
      %v663 = vunpack.c.h.b16 %v407
      %v664 = vpack.c.b16 %v540, %v536
      %v665 = vpack.c.b16 %v541, %v537
      %v666 = vpack.c.b16 %v542, %v538
      %v667 = vpack.c.b16 %v543, %v539
      %v668 = vpack.c.b16 %v548, %v544
      %v669 = vpack.c.b16 %v549, %v545
      %v670 = vpack.c.b16 %v550, %v546
      %v671 = vpack.c.b16 %v551, %v547
      %v672 = vpack.c.b16 %v556, %v552
      %v673 = vpack.c.b16 %v557, %v553
      %v674 = vpack.c.b16 %v558, %v554
      %v675 = vpack.c.b16 %v559, %v555
      %v676 = vpack.c.b16 %v564, %v560
      %v677 = vpack.c.b16 %v565, %v561
      %v678 = vpack.c.b16 %v566, %v562
      %v679 = vpack.c.b16 %v567, %v563
      %v680 = vpack.c.b16 %v572, %v568
      %v681 = vpack.c.b16 %v573, %v569
      %v682 = vpack.c.b16 %v574, %v570
      %v683 = vpack.c.b16 %v575, %v571
      %v684 = vpack.c.b16 %v580, %v576
      %v685 = vpack.c.b16 %v581, %v577
      %v686 = vpack.c.b16 %v582, %v578
      %v687 = vpack.c.b16 %v583, %v579
      %v688 = vpack.c.b16 %v588, %v584
      %v689 = vpack.c.b16 %v589, %v585
      %v690 = vpack.c.b16 %v590, %v586
      %v691 = vpack.c.b16 %v591, %v587
      %v692 = vpack.c.b16 %v596, %v592
      %v693 = vpack.c.b16 %v597, %v593
      %v694 = vpack.c.b16 %v598, %v594
      %v695 = vpack.c.b16 %v599, %v595
      %v696 = vpack.c.b16 %v604, %v600
      %v697 = vpack.c.b16 %v605, %v601
      %v698 = vpack.c.b16 %v606, %v602
      %v699 = vpack.c.b16 %v607, %v603
      %v700 = vpack.c.b16 %v612, %v608
      %v701 = vpack.c.b16 %v613, %v609
      %v702 = vpack.c.b16 %v614, %v610
      %v703 = vpack.c.b16 %v615, %v611
      %v704 = vpack.c.b16 %v620, %v616
      %v705 = vpack.c.b16 %v621, %v617
      %v706 = vpack.c.b16 %v622, %v618
      %v707 = vpack.c.b16 %v623, %v619
      %v708 = vpack.c.b16 %v628, %v624
      %v709 = vpack.c.b16 %v629, %v625
      %v710 = vpack.c.b16 %v630, %v626
      %v711 = vpack.c.b16 %v631, %v627
      %v712 = vpack.c.b16 %v636, %v632
      %v713 = vpack.c.b16 %v637, %v633
      %v714 = vpack.c.b16 %v638, %v634
      %v715 = vpack.c.b16 %v639, %v635
      %v716 = vpack.c.b16 %v644, %v640
      %v717 = vpack.c.b16 %v645, %v641
      %v718 = vpack.c.b16 %v646, %v642
      %v719 = vpack.c.b16 %v647, %v643
      %v720 = vpack.c.b16 %v652, %v648
      %v721 = vpack.c.b16 %v653, %v649
      %v722 = vpack.c.b16 %v654, %v650
      %v723 = vpack.c.b16 %v655, %v651
      %v724 = vpack.c.b16 %v660, %v656
      %v725 = vpack.c.b16 %v661, %v657
      %v726 = vpack.c.b16 %v662, %v658
      %v727 = vpack.c.b16 %v663, %v659
      %v856 = vunpack.c.l.b16 %v408
      %v857 = vunpack.c.l.b16 %v409
      %v858 = vunpack.c.l.b16 %v410
      %v859 = vunpack.c.l.b16 %v411
      %v860 = vunpack.c.l.b16 %v412
      %v861 = vunpack.c.l.b16 %v413
      %v862 = vunpack.c.l.b16 %v414
      %v863 = vunpack.c.l.b16 %v415
      %v864 = vunpack.c.l.b16 %v416
      %v865 = vunpack.c.l.b16 %v417
      %v866 = vunpack.c.l.b16 %v418
      %v867 = vunpack.c.l.b16 %v419
      %v868 = vunpack.c.l.b16 %v420
      %v869 = vunpack.c.l.b16 %v421
      %v870 = vunpack.c.l.b16 %v422
      %v871 = vunpack.c.l.b16 %v423
      %v872 = vunpack.c.l.b16 %v424
      %v873 = vunpack.c.l.b16 %v425
      %v874 = vunpack.c.l.b16 %v426
      %v875 = vunpack.c.l.b16 %v427
      %v876 = vunpack.c.l.b16 %v428
      %v877 = vunpack.c.l.b16 %v429
      %v878 = vunpack.c.l.b16 %v430
      %v879 = vunpack.c.l.b16 %v431
      %v880 = vunpack.c.l.b16 %v432
      %v881 = vunpack.c.l.b16 %v433
      %v882 = vunpack.c.l.b16 %v434
      %v883 = vunpack.c.l.b16 %v435
      %v884 = vunpack.c.l.b16 %v436
      %v885 = vunpack.c.l.b16 %v437
      %v886 = vunpack.c.l.b16 %v438
      %v887 = vunpack.c.l.b16 %v439
      %v888 = vunpack.c.l.b16 %v440
      %v889 = vunpack.c.l.b16 %v441
      %v890 = vunpack.c.l.b16 %v442
      %v891 = vunpack.c.l.b16 %v443
      %v892 = vunpack.c.l.b16 %v444
      %v893 = vunpack.c.l.b16 %v445
      %v894 = vunpack.c.l.b16 %v446
      %v895 = vunpack.c.l.b16 %v447
      %v896 = vunpack.c.l.b16 %v448
      %v897 = vunpack.c.l.b16 %v449
      %v898 = vunpack.c.l.b16 %v450
      %v899 = vunpack.c.l.b16 %v451
      %v900 = vunpack.c.l.b16 %v452
      %v901 = vunpack.c.l.b16 %v453
      %v902 = vunpack.c.l.b16 %v454
      %v903 = vunpack.c.l.b16 %v455
      %v904 = vunpack.c.l.b16 %v456
      %v905 = vunpack.c.l.b16 %v457
      %v906 = vunpack.c.l.b16 %v458
      %v907 = vunpack.c.l.b16 %v459
      %v908 = vunpack.c.l.b16 %v460
      %v909 = vunpack.c.l.b16 %v461
      %v910 = vunpack.c.l.b16 %v462
      %v911 = vunpack.c.l.b16 %v463
      %v912 = vunpack.c.l.b16 %v464
      %v913 = vunpack.c.l.b16 %v465
      %v914 = vunpack.c.l.b16 %v466
      %v915 = vunpack.c.l.b16 %v467
      %v916 = vunpack.c.l.b16 %v468
      %v917 = vunpack.c.l.b16 %v469
      %v918 = vunpack.c.l.b16 %v470
      %v919 = vunpack.c.l.b16 %v471
      %v920 = vpack.c.b16 %v857, %v856
      %v921 = vpack.c.b16 %v859, %v858
      %v922 = vpack.c.b16 %v861, %v860
      %v923 = vpack.c.b16 %v863, %v862
      %v924 = vpack.c.b16 %v865, %v864
      %v925 = vpack.c.b16 %v867, %v866
      %v926 = vpack.c.b16 %v869, %v868
      %v927 = vpack.c.b16 %v871, %v870
      %v928 = vpack.c.b16 %v873, %v872
      %v929 = vpack.c.b16 %v875, %v874
      %v930 = vpack.c.b16 %v877, %v876
      %v931 = vpack.c.b16 %v879, %v878
      %v932 = vpack.c.b16 %v881, %v880
      %v933 = vpack.c.b16 %v883, %v882
      %v934 = vpack.c.b16 %v885, %v884
      %v935 = vpack.c.b16 %v887, %v886
      %v936 = vpack.c.b16 %v889, %v888
      %v937 = vpack.c.b16 %v891, %v890
      %v938 = vpack.c.b16 %v893, %v892
      %v939 = vpack.c.b16 %v895, %v894
      %v940 = vpack.c.b16 %v897, %v896
      %v941 = vpack.c.b16 %v899, %v898
      %v942 = vpack.c.b16 %v901, %v900
      %v943 = vpack.c.b16 %v903, %v902
      %v944 = vpack.c.b16 %v905, %v904
      %v945 = vpack.c.b16 %v907, %v906
      %v946 = vpack.c.b16 %v909, %v908
      %v947 = vpack.c.b16 %v911, %v910
      %v948 = vpack.c.b16 %v913, %v912
      %v949 = vpack.c.b16 %v915, %v914
      %v950 = vpack.c.b16 %v917, %v916
      %v951 = vpack.c.b16 %v919, %v918
      %984 = vmatpush.bf16.msra.mxu0 %v927
      %985 = vmatpush.bf16.msra.mxu0 %v926
      %986 = vmatpush.bf16.msra.mxu0 %v925
      %987 = vmatpush.bf16.msra.mxu0 %v924
      %988 = vmatpush.bf16.msra.mxu0 %v923
      %989 = vmatpush.bf16.msra.mxu0 %v922
      %990 = vmatpush.bf16.msra.mxu0 %v921
      %991 = vmatpush.bf16.msra.mxu0 %v920
      %992 = vmatmul.bf16.gmra.mxu0 %v664
      %v993 = vpop.f32.mrf.mxu0
      %v994 = vadd.f32 0.0, %v993
      %v995 = vpop.f32.mrf.mxu0
      %v996 = vadd.f32 0.0, %v995
      %997 = vmatmul.bf16.gmra.mxu0 %v668
      %v998 = vpop.f32.mrf.mxu0
      %v999 = vadd.f32 0.0, %v998
      %v1000 = vpop.f32.mrf.mxu0
      %v1001 = vadd.f32 0.0, %v1000
      %1002 = vmatmul.bf16.gmra.mxu0 %v672
      %v1003 = vpop.f32.mrf.mxu0
      %v1004 = vadd.f32 0.0, %v1003
      %v1005 = vpop.f32.mrf.mxu0
      %v1006 = vadd.f32 0.0, %v1005
      %1007 = vmatmul.bf16.gmra.mxu0 %v676
      %v1008 = vpop.f32.mrf.mxu0
      %v1009 = vadd.f32 0.0, %v1008
      %v1010 = vpop.f32.mrf.mxu0
      %v1011 = vadd.f32 0.0, %v1010
      %1012 = vmatmul.bf16.gmra.mxu0 %v680
      %v1013 = vpop.f32.mrf.mxu0
      %v1014 = vadd.f32 0.0, %v1013
      %v1015 = vpop.f32.mrf.mxu0
      %v1016 = vadd.f32 0.0, %v1015
      %1017 = vmatmul.bf16.gmra.mxu0 %v684
      %v1018 = vpop.f32.mrf.mxu0
      %v1019 = vadd.f32 0.0, %v1018
      %v1020 = vpop.f32.mrf.mxu0
      %v1021 = vadd.f32 0.0, %v1020
      %1022 = vmatmul.bf16.gmra.mxu0 %v688
      %v1023 = vpop.f32.mrf.mxu0
      %v1024 = vadd.f32 0.0, %v1023
      %v1025 = vpop.f32.mrf.mxu0
      %v1026 = vadd.f32 0.0, %v1025
      %1027 = vmatmul.bf16.gmra.mxu0 %v692
      %v1028 = vpop.f32.mrf.mxu0
      %v1029 = vadd.f32 0.0, %v1028
      %v1030 = vpop.f32.mrf.mxu0
      %v1031 = vadd.f32 0.0, %v1030
      %1032 = vmatmul.bf16.gmra.mxu0 %v696
      %v1033 = vpop.f32.mrf.mxu0
      %v1034 = vadd.f32 0.0, %v1033
      %v1035 = vpop.f32.mrf.mxu0
      %v1036 = vadd.f32 0.0, %v1035
      %1037 = vmatmul.bf16.gmra.mxu0 %v700
      %v1038 = vpop.f32.mrf.mxu0
      %v1039 = vadd.f32 0.0, %v1038
      %v1040 = vpop.f32.mrf.mxu0
      %v1041 = vadd.f32 0.0, %v1040
      %1042 = vmatmul.bf16.gmra.mxu0 %v704
      %v1043 = vpop.f32.mrf.mxu0
      %v1044 = vadd.f32 0.0, %v1043
      %v1045 = vpop.f32.mrf.mxu0
      %v1046 = vadd.f32 0.0, %v1045
      %1047 = vmatmul.bf16.gmra.mxu0 %v708
      %v1048 = vpop.f32.mrf.mxu0
      %v1049 = vadd.f32 0.0, %v1048
      %v1050 = vpop.f32.mrf.mxu0
      %v1051 = vadd.f32 0.0, %v1050
      %1052 = vmatmul.bf16.gmra.mxu0 %v712
      %v1053 = vpop.f32.mrf.mxu0
      %v1054 = vadd.f32 0.0, %v1053
      %v1055 = vpop.f32.mrf.mxu0
      %v1056 = vadd.f32 0.0, %v1055
      %1057 = vmatmul.bf16.gmra.mxu0 %v716
      %v1058 = vpop.f32.mrf.mxu0
      %v1059 = vadd.f32 0.0, %v1058
      %v1060 = vpop.f32.mrf.mxu0
      %v1061 = vadd.f32 0.0, %v1060
      %1062 = vmatmul.bf16.gmra.mxu0 %v720
      %v1063 = vpop.f32.mrf.mxu0
      %v1064 = vadd.f32 0.0, %v1063
      %v1065 = vpop.f32.mrf.mxu0
      %v1066 = vadd.f32 0.0, %v1065
      %1067 = vmatmul.bf16.gmra.mxu0 %v724
      %v1068 = vpop.f32.mrf.mxu0
      %v1069 = vadd.f32 0.0, %v1068
      %v1070 = vpop.f32.mrf.mxu0
      %v1071 = vadd.f32 0.0, %v1070
      %1072 = vdwg.mxu0
      %1073 = vmatpush.bf16.msra.mxu0 %v935
      %1074 = vmatpush.bf16.msra.mxu0 %v934
      %1075 = vmatpush.bf16.msra.mxu0 %v933
      %1076 = vmatpush.bf16.msra.mxu0 %v932
      %1077 = vmatpush.bf16.msra.mxu0 %v931
      %1078 = vmatpush.bf16.msra.mxu0 %v930
      %1079 = vmatpush.bf16.msra.mxu0 %v929
      %1080 = vmatpush.bf16.msra.mxu0 %v928
      %1081 = vmatmul.bf16.gmra.mxu0 %v665
      %v1082 = vpop.f32.mrf.mxu0
      %v1083 = vadd.f32 %v994, %v1082
      %v1084 = vpop.f32.mrf.mxu0
      %v1085 = vadd.f32 %v996, %v1084
      %1086 = vmatmul.bf16.gmra.mxu0 %v669
      %v1087 = vpop.f32.mrf.mxu0
      %v1088 = vadd.f32 %v999, %v1087
      %v1089 = vpop.f32.mrf.mxu0
      %v1090 = vadd.f32 %v1001, %v1089
      %1091 = vmatmul.bf16.gmra.mxu0 %v673
      %v1092 = vpop.f32.mrf.mxu0
      %v1093 = vadd.f32 %v1004, %v1092
      %v1094 = vpop.f32.mrf.mxu0
      %v1095 = vadd.f32 %v1006, %v1094
      %1096 = vmatmul.bf16.gmra.mxu0 %v677
      %v1097 = vpop.f32.mrf.mxu0
      %v1098 = vadd.f32 %v1009, %v1097
      %v1099 = vpop.f32.mrf.mxu0
      %v1100 = vadd.f32 %v1011, %v1099
      %1101 = vmatmul.bf16.gmra.mxu0 %v681
      %v1102 = vpop.f32.mrf.mxu0
      %v1103 = vadd.f32 %v1014, %v1102
      %v1104 = vpop.f32.mrf.mxu0
      %v1105 = vadd.f32 %v1016, %v1104
      %1106 = vmatmul.bf16.gmra.mxu0 %v685
      %v1107 = vpop.f32.mrf.mxu0
      %v1108 = vadd.f32 %v1019, %v1107
      %v1109 = vpop.f32.mrf.mxu0
      %v1110 = vadd.f32 %v1021, %v1109
      %1111 = vmatmul.bf16.gmra.mxu0 %v689
      %v1112 = vpop.f32.mrf.mxu0
      %v1113 = vadd.f32 %v1024, %v1112
      %v1114 = vpop.f32.mrf.mxu0
      %v1115 = vadd.f32 %v1026, %v1114
      %1116 = vmatmul.bf16.gmra.mxu0 %v693
      %v1117 = vpop.f32.mrf.mxu0
      %v1118 = vadd.f32 %v1029, %v1117
      %v1119 = vpop.f32.mrf.mxu0
      %v1120 = vadd.f32 %v1031, %v1119
      %1121 = vmatmul.bf16.gmra.mxu0 %v697
      %v1122 = vpop.f32.mrf.mxu0
      %v1123 = vadd.f32 %v1034, %v1122
      %v1124 = vpop.f32.mrf.mxu0
      %v1125 = vadd.f32 %v1036, %v1124
      %1126 = vmatmul.bf16.gmra.mxu0 %v701
      %v1127 = vpop.f32.mrf.mxu0
      %v1128 = vadd.f32 %v1039, %v1127
      %v1129 = vpop.f32.mrf.mxu0
      %v1130 = vadd.f32 %v1041, %v1129
      %1131 = vmatmul.bf16.gmra.mxu0 %v705
      %v1132 = vpop.f32.mrf.mxu0
      %v1133 = vadd.f32 %v1044, %v1132
      %v1134 = vpop.f32.mrf.mxu0
      %v1135 = vadd.f32 %v1046, %v1134
      %1136 = vmatmul.bf16.gmra.mxu0 %v709
      %v1137 = vpop.f32.mrf.mxu0
      %v1138 = vadd.f32 %v1049, %v1137
      %v1139 = vpop.f32.mrf.mxu0
      %v1140 = vadd.f32 %v1051, %v1139
      %1141 = vmatmul.bf16.gmra.mxu0 %v713
      %v1142 = vpop.f32.mrf.mxu0
      %v1143 = vadd.f32 %v1054, %v1142
      %v1144 = vpop.f32.mrf.mxu0
      %v1145 = vadd.f32 %v1056, %v1144
      %1146 = vmatmul.bf16.gmra.mxu0 %v717
      %v1147 = vpop.f32.mrf.mxu0
      %v1148 = vadd.f32 %v1059, %v1147
      %v1149 = vpop.f32.mrf.mxu0
      %v1150 = vadd.f32 %v1061, %v1149
      %1151 = vmatmul.bf16.gmra.mxu0 %v721
      %v1152 = vpop.f32.mrf.mxu0
      %v1153 = vadd.f32 %v1064, %v1152
      %v1154 = vpop.f32.mrf.mxu0
      %v1155 = vadd.f32 %v1066, %v1154
      %1156 = vmatmul.bf16.gmra.mxu0 %v725
      %v1157 = vpop.f32.mrf.mxu0
      %v1158 = vadd.f32 %v1069, %v1157
      %v1159 = vpop.f32.mrf.mxu0
      %v1160 = vadd.f32 %v1071, %v1159
      %1161 = vdwg.mxu0
      %1162 = vmatpush.bf16.msra.mxu0 %v943
      %1163 = vmatpush.bf16.msra.mxu0 %v942
      %1164 = vmatpush.bf16.msra.mxu0 %v941
      %1165 = vmatpush.bf16.msra.mxu0 %v940
      %1166 = vmatpush.bf16.msra.mxu0 %v939
      %1167 = vmatpush.bf16.msra.mxu0 %v938
      %1168 = vmatpush.bf16.msra.mxu0 %v937
      %1169 = vmatpush.bf16.msra.mxu0 %v936
      %1170 = vmatmul.bf16.gmra.mxu0 %v666
      %v1171 = vpop.f32.mrf.mxu0
      %v1172 = vadd.f32 %v1083, %v1171
      %v1173 = vpop.f32.mrf.mxu0
      %v1174 = vadd.f32 %v1085, %v1173
      %1175 = vmatmul.bf16.gmra.mxu0 %v670
      %v1176 = vpop.f32.mrf.mxu0
      %v1177 = vadd.f32 %v1088, %v1176
      %v1178 = vpop.f32.mrf.mxu0
      %v1179 = vadd.f32 %v1090, %v1178
      %1180 = vmatmul.bf16.gmra.mxu0 %v674
      %v1181 = vpop.f32.mrf.mxu0
      %v1182 = vadd.f32 %v1093, %v1181
      %v1183 = vpop.f32.mrf.mxu0
      %v1184 = vadd.f32 %v1095, %v1183
      %1185 = vmatmul.bf16.gmra.mxu0 %v678
      %v1186 = vpop.f32.mrf.mxu0
      %v1187 = vadd.f32 %v1098, %v1186
      %v1188 = vpop.f32.mrf.mxu0
      %v1189 = vadd.f32 %v1100, %v1188
      %1190 = vmatmul.bf16.gmra.mxu0 %v682
      %v1191 = vpop.f32.mrf.mxu0
      %v1192 = vadd.f32 %v1103, %v1191
      %v1193 = vpop.f32.mrf.mxu0
      %v1194 = vadd.f32 %v1105, %v1193
      %1195 = vmatmul.bf16.gmra.mxu0 %v686
      %v1196 = vpop.f32.mrf.mxu0
      %v1197 = vadd.f32 %v1108, %v1196
      %v1198 = vpop.f32.mrf.mxu0
      %v1199 = vadd.f32 %v1110, %v1198
      %1200 = vmatmul.bf16.gmra.mxu0 %v690
      %v1201 = vpop.f32.mrf.mxu0
      %v1202 = vadd.f32 %v1113, %v1201
      %v1203 = vpop.f32.mrf.mxu0
      %v1204 = vadd.f32 %v1115, %v1203
      %1205 = vmatmul.bf16.gmra.mxu0 %v694
      %v1206 = vpop.f32.mrf.mxu0
      %v1207 = vadd.f32 %v1118, %v1206
      %v1208 = vpop.f32.mrf.mxu0
      %v1209 = vadd.f32 %v1120, %v1208
      %1210 = vmatmul.bf16.gmra.mxu0 %v698
      %v1211 = vpop.f32.mrf.mxu0
      %v1212 = vadd.f32 %v1123, %v1211
      %v1213 = vpop.f32.mrf.mxu0
      %v1214 = vadd.f32 %v1125, %v1213
      %1215 = vmatmul.bf16.gmra.mxu0 %v702
      %v1216 = vpop.f32.mrf.mxu0
      %v1217 = vadd.f32 %v1128, %v1216
      %v1218 = vpop.f32.mrf.mxu0
      %v1219 = vadd.f32 %v1130, %v1218
      %1220 = vmatmul.bf16.gmra.mxu0 %v706
      %v1221 = vpop.f32.mrf.mxu0
      %v1222 = vadd.f32 %v1133, %v1221
      %v1223 = vpop.f32.mrf.mxu0
      %v1224 = vadd.f32 %v1135, %v1223
      %1225 = vmatmul.bf16.gmra.mxu0 %v710
      %v1226 = vpop.f32.mrf.mxu0
      %v1227 = vadd.f32 %v1138, %v1226
      %v1228 = vpop.f32.mrf.mxu0
      %v1229 = vadd.f32 %v1140, %v1228
      %1230 = vmatmul.bf16.gmra.mxu0 %v714
      %v1231 = vpop.f32.mrf.mxu0
      %v1232 = vadd.f32 %v1143, %v1231
      %v1233 = vpop.f32.mrf.mxu0
      %v1234 = vadd.f32 %v1145, %v1233
      %1235 = vmatmul.bf16.gmra.mxu0 %v718
      %v1236 = vpop.f32.mrf.mxu0
      %v1237 = vadd.f32 %v1148, %v1236
      %v1238 = vpop.f32.mrf.mxu0
      %v1239 = vadd.f32 %v1150, %v1238
      %1240 = vmatmul.bf16.gmra.mxu0 %v722
      %v1241 = vpop.f32.mrf.mxu0
      %v1242 = vadd.f32 %v1153, %v1241
      %v1243 = vpop.f32.mrf.mxu0
      %v1244 = vadd.f32 %v1155, %v1243
      %1245 = vmatmul.bf16.gmra.mxu0 %v726
      %v1246 = vpop.f32.mrf.mxu0
      %v1247 = vadd.f32 %v1158, %v1246
      %v1248 = vpop.f32.mrf.mxu0
      %v1249 = vadd.f32 %v1160, %v1248
      %1250 = vdwg.mxu0
      %1251 = vmatpush.bf16.msra.mxu0 %v951
      %1252 = vmatpush.bf16.msra.mxu0 %v950
      %1253 = vmatpush.bf16.msra.mxu0 %v949
      %1254 = vmatpush.bf16.msra.mxu0 %v948
      %1255 = vmatpush.bf16.msra.mxu0 %v947
      %1256 = vmatpush.bf16.msra.mxu0 %v946
      %1257 = vmatpush.bf16.msra.mxu0 %v945
      %1258 = vmatpush.bf16.msra.mxu0 %v944
      %1259 = vmatmul.bf16.gmra.mxu0 %v667
      %v1260 = vpop.f32.mrf.mxu0
      %v1261 = vadd.f32 %v1172, %v1260
      %v1262 = vpop.f32.mrf.mxu0
      %v1263 = vadd.f32 %v1174, %v1262
      %1264 = vmatmul.bf16.gmra.mxu0 %v671
      %v1265 = vpop.f32.mrf.mxu0
      %v1266 = vadd.f32 %v1177, %v1265
      %v1267 = vpop.f32.mrf.mxu0
      %v1268 = vadd.f32 %v1179, %v1267
      %1269 = vmatmul.bf16.gmra.mxu0 %v675
      %v1270 = vpop.f32.mrf.mxu0
      %v1271 = vadd.f32 %v1182, %v1270
      %v1272 = vpop.f32.mrf.mxu0
      %v1273 = vadd.f32 %v1184, %v1272
      %1274 = vmatmul.bf16.gmra.mxu0 %v679
      %v1275 = vpop.f32.mrf.mxu0
      %v1276 = vadd.f32 %v1187, %v1275
      %v1277 = vpop.f32.mrf.mxu0
      %v1278 = vadd.f32 %v1189, %v1277
      %1279 = vmatmul.bf16.gmra.mxu0 %v683
      %v1280 = vpop.f32.mrf.mxu0
      %v1281 = vadd.f32 %v1192, %v1280
      %v1282 = vpop.f32.mrf.mxu0
      %v1283 = vadd.f32 %v1194, %v1282
      %1284 = vmatmul.bf16.gmra.mxu0 %v687
      %v1285 = vpop.f32.mrf.mxu0
      %v1286 = vadd.f32 %v1197, %v1285
      %v1287 = vpop.f32.mrf.mxu0
      %v1288 = vadd.f32 %v1199, %v1287
      %1289 = vmatmul.bf16.gmra.mxu0 %v691
      %v1290 = vpop.f32.mrf.mxu0
      %v1291 = vadd.f32 %v1202, %v1290
      %v1292 = vpop.f32.mrf.mxu0
      %v1293 = vadd.f32 %v1204, %v1292
      %1294 = vmatmul.bf16.gmra.mxu0 %v695
      %v1295 = vpop.f32.mrf.mxu0
      %v1296 = vadd.f32 %v1207, %v1295
      %v1297 = vpop.f32.mrf.mxu0
      %v1298 = vadd.f32 %v1209, %v1297
      %1299 = vmatmul.bf16.gmra.mxu0 %v699
      %v1300 = vpop.f32.mrf.mxu0
      %v1301 = vadd.f32 %v1212, %v1300
      %v1302 = vpop.f32.mrf.mxu0
      %v1303 = vadd.f32 %v1214, %v1302
      %1304 = vmatmul.bf16.gmra.mxu0 %v703
      %v1305 = vpop.f32.mrf.mxu0
      %v1306 = vadd.f32 %v1217, %v1305
      %v1307 = vpop.f32.mrf.mxu0
      %v1308 = vadd.f32 %v1219, %v1307
      %1309 = vmatmul.bf16.gmra.mxu0 %v707
      %v1310 = vpop.f32.mrf.mxu0
      %v1311 = vadd.f32 %v1222, %v1310
      %v1312 = vpop.f32.mrf.mxu0
      %v1313 = vadd.f32 %v1224, %v1312
      %1314 = vmatmul.bf16.gmra.mxu0 %v711
      %v1315 = vpop.f32.mrf.mxu0
      %v1316 = vadd.f32 %v1227, %v1315
      %v1317 = vpop.f32.mrf.mxu0
      %v1318 = vadd.f32 %v1229, %v1317
      %1319 = vmatmul.bf16.gmra.mxu0 %v715
      %v1320 = vpop.f32.mrf.mxu0
      %v1321 = vadd.f32 %v1232, %v1320
      %v1322 = vpop.f32.mrf.mxu0
      %v1323 = vadd.f32 %v1234, %v1322
      %1324 = vmatmul.bf16.gmra.mxu0 %v719
      %v1325 = vpop.f32.mrf.mxu0
      %v1326 = vadd.f32 %v1237, %v1325
      %v1327 = vpop.f32.mrf.mxu0
      %v1328 = vadd.f32 %v1239, %v1327
      %1329 = vmatmul.bf16.gmra.mxu0 %v723
      %v1330 = vpop.f32.mrf.mxu0
      %v1331 = vadd.f32 %v1242, %v1330
      %v1332 = vpop.f32.mrf.mxu0
      %v1333 = vadd.f32 %v1244, %v1332
      %1334 = vmatmul.bf16.gmra.mxu0 %v727
      %v1335 = vpop.f32.mrf.mxu0
      %v1336 = vadd.f32 %v1247, %v1335
      %v1337 = vpop.f32.mrf.mxu0
      %v1338 = vadd.f32 %v1249, %v1337
      %1339 = vdwg.mxu0
      %v1340 = vadd.f32 %v312, %v1261
      %v1341 = vadd.f32 %v313, %v1263
      %v1342 = vadd.f32 %v314, %v1266
      %v1343 = vadd.f32 %v315, %v1268
      %v1344 = vadd.f32 %v316, %v1271
      %v1345 = vadd.f32 %v317, %v1273
      %v1346 = vadd.f32 %v318, %v1276
      %v1347 = vadd.f32 %v319, %v1278
      %v1348 = vadd.f32 %v320, %v1281
      %v1349 = vadd.f32 %v321, %v1283
      %v1350 = vadd.f32 %v322, %v1286
      %v1351 = vadd.f32 %v323, %v1288
      %v1352 = vadd.f32 %v324, %v1291
      %v1353 = vadd.f32 %v325, %v1293
      %v1354 = vadd.f32 %v326, %v1296
      %v1355 = vadd.f32 %v327, %v1298
      %v1356 = vadd.f32 %v328, %v1301
      %v1357 = vadd.f32 %v329, %v1303
      %v1358 = vadd.f32 %v330, %v1306
      %v1359 = vadd.f32 %v331, %v1308
      %v1360 = vadd.f32 %v332, %v1311
      %v1361 = vadd.f32 %v333, %v1313
      %v1362 = vadd.f32 %v334, %v1316
      %v1363 = vadd.f32 %v335, %v1318
      %v1364 = vadd.f32 %v336, %v1321
      %v1365 = vadd.f32 %v337, %v1323
      %v1366 = vadd.f32 %v338, %v1326
      %v1367 = vadd.f32 %v339, %v1328
      %v1368 = vadd.f32 %v340, %v1331
      %v1369 = vadd.f32 %v341, %v1333
      %v1370 = vadd.f32 %v342, %v1336
      %v1371 = vadd.f32 %v343, %v1338
      %1372 = vst [vmem:[#allocation2] sm:$0xff] %v1340
      %1373 = vst [vmem:[#allocation2 + $0x8] sm:$0xff] %v1341
      %1374 = vst [vmem:[#allocation2 + $0x10] sm:$0xff] %v1342
      %1375 = vst [vmem:[#allocation2 + $0x18] sm:$0xff] %v1343
      %1376 = vst [vmem:[#allocation2 + $0x20] sm:$0xff] %v1344
      %1377 = vst [vmem:[#allocation2 + $0x28] sm:$0xff] %v1345
      %1378 = vst [vmem:[#allocation2 + $0x30] sm:$0xff] %v1346
      %1379 = vst [vmem:[#allocation2 + $0x38] sm:$0xff] %v1347
      %1380 = vst [vmem:[#allocation2 + $0x40] sm:$0xff] %v1348
      %1381 = vst [vmem:[#allocation2 + $0x48] sm:$0xff] %v1349
      %1382 = vst [vmem:[#allocation2 + $0x50] sm:$0xff] %v1350
      %1383 = vst [vmem:[#allocation2 + $0x58] sm:$0xff] %v1351
      %1384 = vst [vmem:[#allocation2 + $0x60] sm:$0xff] %v1352
      %1385 = vst [vmem:[#allocation2 + $0x68] sm:$0xff] %v1353
      %1386 = vst [vmem:[#allocation2 + $0x70] sm:$0xff] %v1354
      %1387 = vst [vmem:[#allocation2 + $0x78] sm:$0xff] %v1355
      %1388 = vst [vmem:[#allocation2 + $0x80] sm:$0xff] %v1356
      %1389 = vst [vmem:[#allocation2 + $0x88] sm:$0xff] %v1357
      %1390 = vst [vmem:[#allocation2 + $0x90] sm:$0xff] %v1358
      %1391 = vst [vmem:[#allocation2 + $0x98] sm:$0xff] %v1359
      %1392 = vst [vmem:[#allocation2 + $0xa0] sm:$0xff] %v1360
      %1393 = vst [vmem:[#allocation2 + $0xa8] sm:$0xff] %v1361
      %1394 = vst [vmem:[#allocation2 + $0xb0] sm:$0xff] %v1362
      %1395 = vst [vmem:[#allocation2 + $0xb8] sm:$0xff] %v1363
      %1396 = vst [vmem:[#allocation2 + $0xc0] sm:$0xff] %v1364
      %1397 = vst [vmem:[#allocation2 + $0xc8] sm:$0xff] %v1365
      %1398 = vst [vmem:[#allocation2 + $0xd0] sm:$0xff] %v1366
      %1399 = vst [vmem:[#allocation2 + $0xd8] sm:$0xff] %v1367
      %1400 = vst [vmem:[#allocation2 + $0xe0] sm:$0xff] %v1368
      %1401 = vst [vmem:[#allocation2 + $0xe8] sm:$0xff] %v1369
      %1402 = vst [vmem:[#allocation2 + $0xf0] sm:$0xff] %v1370
      %1403 = vst [vmem:[#allocation2 + $0xf8] sm:$0xff] %v1371
      // Predicated region
      $region41: #{gcn_conv.3} parent=35 // pred_check
        %p1404 = pneg %p276
      $region42: #{gcn_conv.3} parent=35 // pred_check_branch
        %1406 = sbr.rel (%p1404) target = $region44
      $region43: #{gcn_conv.3} parent=35 // pred_region
        %v1407 = vld [vmem:[%s268] sm:$0xff]
        %v1408 = vld [vmem:[%s268 + $0x8] sm:$0xff]
        %v1409 = vld [vmem:[%s268 + $0x10] sm:$0xff]
        %v1410 = vld [vmem:[%s268 + $0x18] sm:$0xff]
        %v1411 = vld [vmem:[%s268 + $0x20] sm:$0xff]
        %v1412 = vld [vmem:[%s268 + $0x28] sm:$0xff]
        %v1413 = vld [vmem:[%s268 + $0x30] sm:$0xff]
        %v1414 = vld [vmem:[%s268 + $0x38] sm:$0xff]
        %v1415 = vld [vmem:[%s268 + $0x40] sm:$0xff]
        %v1416 = vld [vmem:[%s268 + $0x48] sm:$0xff]
        %v1417 = vld [vmem:[%s268 + $0x50] sm:$0xff]
        %v1418 = vld [vmem:[%s268 + $0x58] sm:$0xff]
        %v1419 = vld [vmem:[%s268 + $0x60] sm:$0xff]
        %v1420 = vld [vmem:[%s268 + $0x68] sm:$0xff]
        %v1421 = vld [vmem:[%s268 + $0x70] sm:$0xff]
        %v1422 = vld [vmem:[%s268 + $0x78] sm:$0xff]
        %v1423 = vld [vmem:[%s268 + $0x80] sm:$0xff]
        %v1424 = vld [vmem:[%s268 + $0x88] sm:$0xff]
        %v1425 = vld [vmem:[%s268 + $0x90] sm:$0xff]
        %v1426 = vld [vmem:[%s268 + $0x98] sm:$0xff]
        %v1427 = vld [vmem:[%s268 + $0xa0] sm:$0xff]
        %v1428 = vld [vmem:[%s268 + $0xa8] sm:$0xff]
        %v1429 = vld [vmem:[%s268 + $0xb0] sm:$0xff]
        %v1430 = vld [vmem:[%s268 + $0xb8] sm:$0xff]
        %v1431 = vld [vmem:[%s268 + $0xc0] sm:$0xff]
        %v1432 = vld [vmem:[%s268 + $0xc8] sm:$0xff]
        %v1433 = vld [vmem:[%s268 + $0xd0] sm:$0xff]
        %v1434 = vld [vmem:[%s268 + $0xd8] sm:$0xff]
        %v1435 = vld [vmem:[%s268 + $0xe0] sm:$0xff]
        %v1436 = vld [vmem:[%s268 + $0xe8] sm:$0xff]
        %v1437 = vld [vmem:[%s268 + $0xf0] sm:$0xff]
        %v1438 = vld [vmem:[%s268 + $0xf8] sm:$0xff]
        %v1439 = vld [vmem:[#allocation2] sm:$0xff]
        %v1440 = vld [vmem:[#allocation2 + $0x8] sm:$0xff]
        %v1441 = vld [vmem:[#allocation2 + $0x10] sm:$0xff]
        %v1442 = vld [vmem:[#allocation2 + $0x18] sm:$0xff]
        %v1443 = vld [vmem:[#allocation2 + $0x20] sm:$0xff]
        %v1444 = vld [vmem:[#allocation2 + $0x28] sm:$0xff]
        %v1445 = vld [vmem:[#allocation2 + $0x30] sm:$0xff]
        %v1446 = vld [vmem:[#allocation2 + $0x38] sm:$0xff]
        %v1447 = vld [vmem:[#allocation2 + $0x40] sm:$0xff]
        %v1448 = vld [vmem:[#allocation2 + $0x48] sm:$0xff]
        %v1449 = vld [vmem:[#allocation2 + $0x50] sm:$0xff]
        %v1450 = vld [vmem:[#allocation2 + $0x58] sm:$0xff]
        %v1451 = vld [vmem:[#allocation2 + $0x60] sm:$0xff]
        %v1452 = vld [vmem:[#allocation2 + $0x68] sm:$0xff]
        %v1453 = vld [vmem:[#allocation2 + $0x70] sm:$0xff]
        %v1454 = vld [vmem:[#allocation2 + $0x78] sm:$0xff]
        %v1455 = vld [vmem:[#allocation2 + $0x80] sm:$0xff]
        %v1456 = vld [vmem:[#allocation2 + $0x88] sm:$0xff]
        %v1457 = vld [vmem:[#allocation2 + $0x90] sm:$0xff]
        %v1458 = vld [vmem:[#allocation2 + $0x98] sm:$0xff]
        %v1459 = vld [vmem:[#allocation2 + $0xa0] sm:$0xff]
        %v1460 = vld [vmem:[#allocation2 + $0xa8] sm:$0xff]
        %v1461 = vld [vmem:[#allocation2 + $0xb0] sm:$0xff]
        %v1462 = vld [vmem:[#allocation2 + $0xb8] sm:$0xff]
        %v1463 = vld [vmem:[#allocation2 + $0xc0] sm:$0xff]
        %v1464 = vld [vmem:[#allocation2 + $0xc8] sm:$0xff]
        %v1465 = vld [vmem:[#allocation2 + $0xd0] sm:$0xff]
        %v1466 = vld [vmem:[#allocation2 + $0xd8] sm:$0xff]
        %v1467 = vld [vmem:[#allocation2 + $0xe0] sm:$0xff]
        %v1468 = vld [vmem:[#allocation2 + $0xe8] sm:$0xff]
        %v1469 = vld [vmem:[#allocation2 + $0xf0] sm:$0xff]
        %v1470 = vld [vmem:[#allocation2 + $0xf8] sm:$0xff]
        %1472 = vset.pattern.permute.xlu0 0
        %1473 = vperm.xlu0 %1472, %v1407
        %v1474 = vpop.permute.xlu0 %1473
        %1477 = vset.pattern.permute.xlu0 0
        %1478 = vperm.xlu0 %1477, %v1408
        %v1479 = vpop.permute.xlu0 %1478
        %1482 = vset.pattern.permute.xlu0 0
        %1483 = vperm.xlu0 %1482, %v1409
        %v1484 = vpop.permute.xlu0 %1483
        %1487 = vset.pattern.permute.xlu0 0
        %1488 = vperm.xlu0 %1487, %v1410
        %v1489 = vpop.permute.xlu0 %1488
        %1492 = vset.pattern.permute.xlu0 0
        %1493 = vperm.xlu0 %1492, %v1411
        %v1494 = vpop.permute.xlu0 %1493
        %1497 = vset.pattern.permute.xlu0 0
        %1498 = vperm.xlu0 %1497, %v1412
        %v1499 = vpop.permute.xlu0 %1498
        %1502 = vset.pattern.permute.xlu0 0
        %1503 = vperm.xlu0 %1502, %v1413
        %v1504 = vpop.permute.xlu0 %1503
        %1507 = vset.pattern.permute.xlu0 0
        %1508 = vperm.xlu0 %1507, %v1414
        %v1509 = vpop.permute.xlu0 %1508
        %1512 = vset.pattern.permute.xlu0 0
        %1513 = vperm.xlu0 %1512, %v1415
        %v1514 = vpop.permute.xlu0 %1513
        %1517 = vset.pattern.permute.xlu0 0
        %1518 = vperm.xlu0 %1517, %v1416
        %v1519 = vpop.permute.xlu0 %1518
        %1522 = vset.pattern.permute.xlu0 0
        %1523 = vperm.xlu0 %1522, %v1417
        %v1524 = vpop.permute.xlu0 %1523
        %1527 = vset.pattern.permute.xlu0 0
        %1528 = vperm.xlu0 %1527, %v1418
        %v1529 = vpop.permute.xlu0 %1528
        %1532 = vset.pattern.permute.xlu0 0
        %1533 = vperm.xlu0 %1532, %v1419
        %v1534 = vpop.permute.xlu0 %1533
        %1537 = vset.pattern.permute.xlu0 0
        %1538 = vperm.xlu0 %1537, %v1420
        %v1539 = vpop.permute.xlu0 %1538
        %1542 = vset.pattern.permute.xlu0 0
        %1543 = vperm.xlu0 %1542, %v1421
        %v1544 = vpop.permute.xlu0 %1543
        %1547 = vset.pattern.permute.xlu0 0
        %1548 = vperm.xlu0 %1547, %v1422
        %v1549 = vpop.permute.xlu0 %1548
        %1552 = vset.pattern.permute.xlu0 0
        %1553 = vperm.xlu0 %1552, %v1423
        %v1554 = vpop.permute.xlu0 %1553
        %1557 = vset.pattern.permute.xlu0 0
        %1558 = vperm.xlu0 %1557, %v1424
        %v1559 = vpop.permute.xlu0 %1558
        %1562 = vset.pattern.permute.xlu0 0
        %1563 = vperm.xlu0 %1562, %v1425
        %v1564 = vpop.permute.xlu0 %1563
        %1567 = vset.pattern.permute.xlu0 0
        %1568 = vperm.xlu0 %1567, %v1426
        %v1569 = vpop.permute.xlu0 %1568
        %1572 = vset.pattern.permute.xlu0 0
        %1573 = vperm.xlu0 %1572, %v1427
        %v1574 = vpop.permute.xlu0 %1573
        %1577 = vset.pattern.permute.xlu0 0
        %1578 = vperm.xlu0 %1577, %v1428
        %v1579 = vpop.permute.xlu0 %1578
        %1582 = vset.pattern.permute.xlu0 0
        %1583 = vperm.xlu0 %1582, %v1429
        %v1584 = vpop.permute.xlu0 %1583
        %1587 = vset.pattern.permute.xlu0 0
        %1588 = vperm.xlu0 %1587, %v1430
        %v1589 = vpop.permute.xlu0 %1588
        %1592 = vset.pattern.permute.xlu0 0
        %1593 = vperm.xlu0 %1592, %v1431
        %v1594 = vpop.permute.xlu0 %1593
        %1597 = vset.pattern.permute.xlu0 0
        %1598 = vperm.xlu0 %1597, %v1432
        %v1599 = vpop.permute.xlu0 %1598
        %1602 = vset.pattern.permute.xlu0 0
        %1603 = vperm.xlu0 %1602, %v1433
        %v1604 = vpop.permute.xlu0 %1603
        %1607 = vset.pattern.permute.xlu0 0
        %1608 = vperm.xlu0 %1607, %v1434
        %v1609 = vpop.permute.xlu0 %1608
        %1612 = vset.pattern.permute.xlu0 0
        %1613 = vperm.xlu0 %1612, %v1435
        %v1614 = vpop.permute.xlu0 %1613
        %1617 = vset.pattern.permute.xlu0 0
        %1618 = vperm.xlu0 %1617, %v1436
        %v1619 = vpop.permute.xlu0 %1618
        %1622 = vset.pattern.permute.xlu0 0
        %1623 = vperm.xlu0 %1622, %v1437
        %v1624 = vpop.permute.xlu0 %1623
        %1627 = vset.pattern.permute.xlu0 0
        %1628 = vperm.xlu0 %1627, %v1438
        %v1629 = vpop.permute.xlu0 %1628
        %v1631 = vmul.f32 %v1474, %v1439
        %v1632 = vmul.f32 %v1479, %v1440
        %v1633 = vmul.f32 %v1484, %v1441
        %v1634 = vmul.f32 %v1489, %v1442
        %v1635 = vmul.f32 %v1494, %v1443
        %v1636 = vmul.f32 %v1499, %v1444
        %v1637 = vmul.f32 %v1504, %v1445
        %v1638 = vmul.f32 %v1509, %v1446
        %v1639 = vmul.f32 %v1514, %v1447
        %v1640 = vmul.f32 %v1519, %v1448
        %v1641 = vmul.f32 %v1524, %v1449
        %v1642 = vmul.f32 %v1529, %v1450
        %v1643 = vmul.f32 %v1534, %v1451
        %v1644 = vmul.f32 %v1539, %v1452
        %v1645 = vmul.f32 %v1544, %v1453
        %v1646 = vmul.f32 %v1549, %v1454
        %v1647 = vmul.f32 %v1554, %v1455
        %v1648 = vmul.f32 %v1559, %v1456
        %v1649 = vmul.f32 %v1564, %v1457
        %v1650 = vmul.f32 %v1569, %v1458
        %v1651 = vmul.f32 %v1574, %v1459
        %v1652 = vmul.f32 %v1579, %v1460
        %v1653 = vmul.f32 %v1584, %v1461
        %v1654 = vmul.f32 %v1589, %v1462
        %v1655 = vmul.f32 %v1594, %v1463
        %v1656 = vmul.f32 %v1599, %v1464
        %v1657 = vmul.f32 %v1604, %v1465
        %v1658 = vmul.f32 %v1609, %v1466
        %v1659 = vmul.f32 %v1614, %v1467
        %v1660 = vmul.f32 %v1619, %v1468
        %v1661 = vmul.f32 %v1624, %v1469
        %v1662 = vmul.f32 %v1629, %v1470
        %v1663 = vld [vmem:[%s3] sm:$0x1]
        %v1665 = vperm.slane %v1663, 0
        %v1667 = vadd.f32 %v1631, %v1665
        %v1668 = vadd.f32 %v1632, %v1665
        %v1669 = vadd.f32 %v1633, %v1665
        %v1670 = vadd.f32 %v1634, %v1665
        %v1671 = vadd.f32 %v1635, %v1665
        %v1672 = vadd.f32 %v1636, %v1665
        %v1673 = vadd.f32 %v1637, %v1665
        %v1674 = vadd.f32 %v1638, %v1665
        %v1675 = vadd.f32 %v1639, %v1665
        %v1676 = vadd.f32 %v1640, %v1665
        %v1677 = vadd.f32 %v1641, %v1665
        %v1678 = vadd.f32 %v1642, %v1665
        %v1679 = vadd.f32 %v1643, %v1665
        %v1680 = vadd.f32 %v1644, %v1665
        %v1681 = vadd.f32 %v1645, %v1665
        %v1682 = vadd.f32 %v1646, %v1665
        %v1683 = vadd.f32 %v1647, %v1665
        %v1684 = vadd.f32 %v1648, %v1665
        %v1685 = vadd.f32 %v1649, %v1665
        %v1686 = vadd.f32 %v1650, %v1665
        %v1687 = vadd.f32 %v1651, %v1665
        %v1688 = vadd.f32 %v1652, %v1665
        %v1689 = vadd.f32 %v1653, %v1665
        %v1690 = vadd.f32 %v1654, %v1665
        %v1691 = vadd.f32 %v1655, %v1665
        %v1692 = vadd.f32 %v1656, %v1665
        %v1693 = vadd.f32 %v1657, %v1665
        %v1694 = vadd.f32 %v1658, %v1665
        %v1695 = vadd.f32 %v1659, %v1665
        %v1696 = vadd.f32 %v1660, %v1665
        %v1697 = vadd.f32 %v1661, %v1665
        %v1698 = vadd.f32 %v1662, %v1665
        %1699 = vst [vmem:[%s274] sm:$0xff] %v1667
        %1700 = vst [vmem:[%s274 + $0x8] sm:$0xff] %v1668
        %1701 = vst [vmem:[%s274 + $0x10] sm:$0xff] %v1669
        %1702 = vst [vmem:[%s274 + $0x18] sm:$0xff] %v1670
        %1703 = vst [vmem:[%s274 + $0x20] sm:$0xff] %v1671
        %1704 = vst [vmem:[%s274 + $0x28] sm:$0xff] %v1672
        %1705 = vst [vmem:[%s274 + $0x30] sm:$0xff] %v1673
        %1706 = vst [vmem:[%s274 + $0x38] sm:$0xff] %v1674
        %1707 = vst [vmem:[%s274 + $0x40] sm:$0xff] %v1675
        %1708 = vst [vmem:[%s274 + $0x48] sm:$0xff] %v1676
        %1709 = vst [vmem:[%s274 + $0x50] sm:$0xff] %v1677
        %1710 = vst [vmem:[%s274 + $0x58] sm:$0xff] %v1678
        %1711 = vst [vmem:[%s274 + $0x60] sm:$0xff] %v1679
        %1712 = vst [vmem:[%s274 + $0x68] sm:$0xff] %v1680
        %1713 = vst [vmem:[%s274 + $0x70] sm:$0xff] %v1681
        %1714 = vst [vmem:[%s274 + $0x78] sm:$0xff] %v1682
        %1715 = vst [vmem:[%s274 + $0x80] sm:$0xff] %v1683
        %1716 = vst [vmem:[%s274 + $0x88] sm:$0xff] %v1684
        %1717 = vst [vmem:[%s274 + $0x90] sm:$0xff] %v1685
        %1718 = vst [vmem:[%s274 + $0x98] sm:$0xff] %v1686
        %1719 = vst [vmem:[%s274 + $0xa0] sm:$0xff] %v1687
        %1720 = vst [vmem:[%s274 + $0xa8] sm:$0xff] %v1688
        %1721 = vst [vmem:[%s274 + $0xb0] sm:$0xff] %v1689
        %1722 = vst [vmem:[%s274 + $0xb8] sm:$0xff] %v1690
        %1723 = vst [vmem:[%s274 + $0xc0] sm:$0xff] %v1691
        %1724 = vst [vmem:[%s274 + $0xc8] sm:$0xff] %v1692
        %1725 = vst [vmem:[%s274 + $0xd0] sm:$0xff] %v1693
        %1726 = vst [vmem:[%s274 + $0xd8] sm:$0xff] %v1694
        %1727 = vst [vmem:[%s274 + $0xe0] sm:$0xff] %v1695
        %1728 = vst [vmem:[%s274 + $0xe8] sm:$0xff] %v1696
        %1729 = vst [vmem:[%s274 + $0xf0] sm:$0xff] %v1697
        %1730 = vst [vmem:[%s274 + $0xf8] sm:$0xff] %v1698
      $region44: #{gcn_conv.3} parent=35 // pred_fallthru
        _
      %s1731 = smul.u32 32, %s19
      %p1732 = scmp.lt.s32.totalorder %s1731, 63
      %s1733 = scalar_select %p1732, %s1731, 63
      %s1734 = smul.addr %s1733, 8
      %s1735 = scalar_lea.vmem %s4, %s1734
      // Predicated region
      $region45: #{gcn_conv.3} parent=35 // pred_check
        %p1736 = pneg %p146
      $region46: #{gcn_conv.3} parent=35 // pred_check_branch
        %1738 = sbr.rel (%p1736) target = $region48
      $region47: #{gcn_conv.3} parent=35 // pred_region
        %s1739 = smul.u32 32, %s19
      $region48: #{gcn_conv.3} parent=35 // pred_fallthru
        _
    $region36: #{gcn_conv.3} parent=5 // pred_fallthru
      _
    %p1740 = scmp.le.s32.totalorder 2, %s10
    // Predicated region
    $region49: #{gcn_conv.3} parent=5 // pred_check
      %p1741 = pneg %p1740
    $region50: #{gcn_conv.3} parent=5 // pred_check_branch
      %1743 = sbr.rel (%p1741) target = $region52
    $region51: #{gcn_conv.3} parent=5 // pred_region
      %s1744 = ssub.s32 %s10, 2
      // Predicated region
      $region53: #{gcn_conv.3} parent=51 // pred_check
        %p1745 = pneg %p152
      $region54: #{gcn_conv.3} parent=51 // pred_check_branch
        %1747 = sbr.rel (%p1745) target = $region56
      $region55: #{gcn_conv.3} parent=51 // pred_region
        %s1748 = smul.u32 32, %s21
        %p1749 = scmp.lt.s32.totalorder %s1748, 63
        %s1750 = scalar_select %p1749, %s1748, 63
        %s1751 = smul.addr %s1750, 8
        %s1752 = scalar_lea.vmem %s4, %s1751
      $region56: #{gcn_conv.3} parent=51 // pred_fallthru
        _
    $region52: #{gcn_conv.3} parent=5 // pred_fallthru
      _
  $region6: #{gcn_conv.3} parent=0 // loop_footer
    %s14 = sadd.s32 1, %s10
  $region7: #{gcn_conv.3} parent=0 // loop_footer_branch
    %9 = sbr.rel target = $region3
  $region8: #{gcn_conv.3} parent=0 // loop_exit
    _

</llo_original>
